<compile_context>
chip_gen: v6e
topology: v6e:2x2x1
jax: 0.10.0
libtpu: 0.0.40
codegen_flags: <defaults>
</compile_context>

<pallas_src>
import functools
import math

import jax
import jax.numpy as jnp
from jax import lax
from jax.experimental import pallas as pl
from jax.experimental.pallas import tpu as pltpu


def _self_att_kernel(T, x_ref, len_ref, w0_ref, w1_ref, w2_ref, b_ref,
                     gamma_ref, out_ref):
    BT, C = x_ref.shape                   # BT = Bb * T (token-major slab)
    x = x_ref[...]                        # (BT, C) f32
    L = len_ref[...]                      # (BT, 1) i32: sample length per token

    # ---- per-row metadata: O(1) vector ops, no per-sample loop -------------
    tok = lax.broadcasted_iota(jnp.int32, (BT, 1), 0)
    if (T & (T - 1)) == 0:
        tok_in = tok & (T - 1)            # token index within its sample
    else:
        tok_in = lax.rem(tok, T)
    off = tok - tok_in                    # sample start row (absolute)
    valid = tok_in < L                    # token participates in attention
    scale = lax.rsqrt(jnp.maximum(L, 1).astype(jnp.float32))   # 1/sqrt(L)

    # ---- Conv1d(k=3, pad=1) for q|k|v: three per-tap dots (no lane concat) --
    xm = jnp.where(valid, x, 0.0)         # zero tokens >= L (conv zero pad)
    # Shifted copies; sample boundaries / sequence edges masked to zero so the
    # wrap-around rows introduced by the flat roll never leak across samples.
    x_prev = jnp.where(tok_in == 0, 0.0, pltpu.roll(xm, shift=1, axis=0))
    x_next = jnp.where(tok_in == T - 1, 0.0, pltpu.roll(xm, shift=BT - 1, axis=0))
    qkv = (jnp.dot(x_prev.astype(jnp.bfloat16), w0_ref[...],
                   preferred_element_type=jnp.float32)
           + jnp.dot(xm.astype(jnp.bfloat16), w1_ref[...],
                     preferred_element_type=jnp.float32)
           + jnp.dot(x_next.astype(jnp.bfloat16), w2_ref[...],
                     preferred_element_type=jnp.float32))
    qkv = qkv + b_ref[...]                # (BT, 3C) f32

    q = qkv[:, 0 * C:1 * C].astype(jnp.bfloat16)
    k = qkv[:, 1 * C:2 * C].astype(jnp.bfloat16)
    v = qkv[:, 2 * C:3 * C].astype(jnp.bfloat16)

    # ---- block-diagonal attention over the whole slab ----------------------
    scores = lax.dot_general(q, k, (((1,), (1,)), ((), ())),
                             preferred_element_type=jnp.float32)   # (BT, BT)
    scores = scores * scale                                        # per-row 1/sqrt(L)
    col = lax.broadcasted_iota(jnp.int32, (BT, BT), 1)
    allowed = (col >= off) & (col < off + L)    # same sample AND key index < L
    scores = jnp.where(allowed, scores, -1e30)
    scores = scores - scores.max(axis=-1, keepdims=True)
    p = jnp.exp(scores)
    p = p * pl.reciprocal(p.sum(axis=-1, keepdims=True), approx=True)
    out_att = jnp.dot(p.astype(jnp.bfloat16), v,
                      preferred_element_type=jnp.float32)          # (BT, C)

    gamma = gamma_ref[0, 0]
    # Attended tokens: gamma*out + residual; remaining tokens: pass-through.
    out_ref[...] = jnp.where(valid, gamma * out_att + x, x)


def prepare_params(Wq, bq, Wk, bk, Wv, bv, gamma):
    """One-time parameter repack (at load time, NOT per forward call).

    Conv1d weights (C_out, C_in, 3) become three per-tap matrices of shape
    (C_in, 3*C_out): tap t in {prev, cur, next}, columns = [q | k | v]."""
    C = Wq.shape[0]

    def tap(W, t):                                     # -> (C_in, C_out)
        return jnp.asarray(W, jnp.float32)[:, :, t].T

    W_taps = tuple(
        jnp.concatenate([tap(Wq, t), tap(Wk, t), tap(Wv, t)], axis=1)
        .astype(jnp.bfloat16)                          # (C, 3C)
        for t in range(3))
    b_fused = jnp.concatenate([bq, bk, bv]).reshape(1, 3 * C).astype(jnp.float32)
    gamma = jnp.reshape(jnp.asarray(gamma, jnp.float32), (1, 1))
    return W_taps, b_fused, gamma


def self_attention_support_forward(x, q_len, W_taps, b_fused, gamma, *, block_b=8):
    """x: (B, T, C) f32, q_len: (B,) int, fused params from prepare_params().

    block_b: samples per grid step.  Pick it so Bb*T is a multiple of 128 when
    possible (lane-dense slab); on v7x also keep the resulting grid >= 2 so
    both TensorCores get work.  On v6e (128 MiB VMEM) block_b can be raised
    further; VMEM use here is tiny (~ (Bb*T)^2 * 4 bytes for the score tile)."""
    B, T, C = x.shape
    Bb = max(1, min(block_b, B))
    assert (Bb * T) % 8 == 0, "Bb*T must be a multiple of 8 (sublane constraint)"
    B_pad = pl.cdiv(B, Bb) * Bb
    if B_pad != B:                       # pad batch; padded samples get L = 0
        x = jnp.pad(x, ((0, B_pad - B), (0, 0), (0, 0)))
        q_len = jnp.pad(q_len, (0, B_pad - B))
    q_len = q_len.astype(jnp.int32)
    x2 = x.reshape(B_pad * T, C).astype(jnp.float32)    # token-major (free reshape)
    # Per-token sample length column: trivial wrapper-side XLA work that keeps
    # the kernel free of the former O(Bb) metadata loop.
    len_tok = jnp.repeat(q_len, T).reshape(B_pad * T, 1)

    BT = Bb * T
    steps = B_pad // Bb
    flops = steps * (2 * BT * (3 * C) * (3 * C) + 2 * 2 * BT * BT * C)
    transcendentals = steps * (BT * BT + 2 * BT)
    bytes_accessed = steps * (2 * BT * C * 4 + BT * 4
                              + 3 * C * 3 * C * 2 + 3 * C * 4 + 4)

    grid_spec = pltpu.PrefetchScalarGridSpec(
        num_scalar_prefetch=0,
        grid=(steps,),
        in_specs=[
            pl.BlockSpec((BT, C), lambda blk: (blk, 0)),        # x slab
            pl.BlockSpec((BT, 1), lambda blk: (blk, 0)),        # per-token L
            pl.BlockSpec((C, 3 * C), lambda blk: (0, 0)),       # tap prev
            pl.BlockSpec((C, 3 * C), lambda blk: (0, 0)),       # tap cur
            pl.BlockSpec((C, 3 * C), lambda blk: (0, 0)),       # tap next
            pl.BlockSpec((1, 3 * C), lambda blk: (0, 0)),       # fused bias
            pl.BlockSpec(memory_space=pltpu.MemorySpace.SMEM),  # gamma
        ],
        out_specs=pl.BlockSpec((BT, C), lambda blk: (blk, 0)),
    )
    out = pl.pallas_call(
        functools.partial(_self_att_kernel, T),
        out_shape=jax.ShapeDtypeStruct((B_pad * T, C), jnp.float32),
        grid_spec=grid_spec,
        cost_estimate=pl.CostEstimate(flops=int(flops),
                                      transcendentals=int(transcendentals),
                                      bytes_accessed=int(bytes_accessed)),
        # Parallel batch-block axis: on v7x both TensorCores split the grid;
        # neutral on v5e/v6e.  VMEM use is far below the 32 MiB default scoped
        # limit at these shapes, so no vmem_limit_bytes override is needed.
        compiler_params=pltpu.CompilerParams(dimension_semantics=("parallel",)),
    )(x2, len_tok, W_taps[0], W_taps[1], W_taps[2], b_fused, gamma)
    return out.reshape(B_pad, T, C)[:B]


def _reference(x, q_len, Wq, bq, Wk, bk, Wv, bv, gamma):
    """Plain-JAX (f32) mirror of the PyTorch forward (per-sample slicing)."""
    B, T, C = x.shape
    outs = []
    for i in range(B):
        L = int(q_len[i])
        x_sub = x[i, :L, :]          # (L, C)
        x_rem = x[i, L:, :]          # (T-L, C)
        xt = x_sub.T                 # (C, L)  == query.permute(0,2,1)

        def conv1d(xc, W, b):
            xp = jnp.pad(xc, ((0, 0), (1, 1)))
            sh = jnp.stack([xp[:, 0:L], xp[:, 1:L + 1], xp[:, 2:L + 2]], axis=-1)
            return jnp.einsum('oik,ilk->ol', W, sh) + b[:, None]

        q = conv1d(xt, Wq, bq).T     # (L, C)
        k = conv1d(xt, Wk, bk)       # (C, L)
        v = conv1d(xt, Wv, bv)       # (C, L)
        attn = jax.nn.softmax((q @ k) / math.sqrt(L), axis=-1) if L > 0 else jnp.zeros((0, 0))
        out = v @ attn.T             # (C, L)
        feat = (gamma * out + xt).T  # (L, C)
        outs.append(jnp.concatenate([feat, x_rem], axis=0))
    return jnp.stack(outs, axis=0)


if __name__ == "__main__":
    B, T, C = 16, 16, 32
    key = jax.random.PRNGKey(0)
    kWq, kbq, kWk, kbk, kWv, kbv, kx = jax.random.split(key, 7)

    bound = 1.0 / math.sqrt(C * 3)   # PyTorch Conv1d default init bound
    Wq = jax.random.uniform(kWq, (C, C, 3), jnp.float32, -bound, bound)
    bq = jax.random.uniform(kbq, (C,), jnp.float32, -bound, bound)
    Wk = jax.random.uniform(kWk, (C, C, 3), jnp.float32, -bound, bound)
    bk = jax.random.uniform(kbk, (C,), jnp.float32, -bound, bound)
    Wv = jax.random.uniform(kWv, (C, C, 3), jnp.float32, -bound, bound)
    bv = jax.random.uniform(kbv, (C,), jnp.float32, -bound, bound)
    # torch init is gamma = 0 (output == input); use a nonzero value so the
    # attention path is actually exercised.
    gamma = jnp.float32(0.5)

    x = jax.random.normal(kx, (B, T, C), jnp.float32)
    q_len = jnp.array([5, 16, 9, 1, 12, 7, 16, 3, 8, 2, 15, 11, 4, 16, 6, 10],
                      dtype=jnp.int32)

    # Parameter repack happens ONCE, outside the per-call forward.
    W_taps, b_fused, gamma_p = prepare_params(Wq, bq, Wk, bk, Wv, bv, gamma)

    # block_b=8 -> BT=128 (lane-dense slab) and grid=2 (even, feeds both v7x TCs).
    out = self_attention_support_forward(x, q_len, W_taps, b_fused, gamma_p,
                                         block_b=8)
    out = jax.block_until_ready(out)

    ref = _reference(x, q_len, Wq, bq, Wk, bk, Wv, bv, gamma)
    # Kernel uses bf16 MXU inputs (f32 accumulation) -> compare against the
    # pure-f32 reference with a bf16-appropriate tolerance.
    if not jnp.allclose(out, ref, atol=3e-2, rtol=3e-2):
        raise AssertionError(
            f"mismatch vs reference, max abs err={float(jnp.max(jnp.abs(out - ref)))}")
    print("KERNEL_OK")
</pallas_src>

<mosaic_0001>
module attributes {stable_mosaic.version = 11 : i64} {
  func.func @_self_att_kernel(%arg0: i32, %arg1: memref<128x32xf32, #tpu.memory_space<vmem>>, %arg2: memref<128x1xi32, #tpu.memory_space<vmem>>, %arg3: memref<32x96xbf16, #tpu.memory_space<vmem>>, %arg4: memref<32x96xbf16, #tpu.memory_space<vmem>>, %arg5: memref<32x96xbf16, #tpu.memory_space<vmem>>, %arg6: memref<1x96xf32, #tpu.memory_space<vmem>>, %arg7: memref<1x1xf32, #tpu.memory_space<smem>>, %arg8: memref<128x32xf32, #tpu.memory_space<vmem>>) attributes {dimension_semantics = [#tpu.dimension_semantics<parallel>], iteration_bounds = array<i64: 2>, scalar_prefetch = 0 : i64, scratch_operands = 0 : i64, tpu.core_type = #tpu.core_type<tc>, window_params = [{transform_indices = @transform_0, window_bounds = array<i64: 128, 32>}, {transform_indices = @transform_1, window_bounds = array<i64: 128, 1>}, {pipeline_mode = #tpu.pipeline_mode<synchronous>, transform_indices = @transform_2, window_bounds = array<i64: 32, 96>}, {pipeline_mode = #tpu.pipeline_mode<synchronous>, transform_indices = @transform_3, window_bounds = array<i64: 32, 96>}, {pipeline_mode = #tpu.pipeline_mode<synchronous>, transform_indices = @transform_4, window_bounds = array<i64: 32, 96>}, {pipeline_mode = #tpu.pipeline_mode<synchronous>, transform_indices = @transform_5, window_bounds = array<i64: 1, 96>}, {transform_indices = @transform_6, window_bounds = array<i64: 1, 1>}, {transform_indices = @transform_7, window_bounds = array<i64: 128, 32>}]} {
    %c0 = arith.constant 0 : index
    %c0_0 = arith.constant 0 : index
    %0 = vector.load %arg1[%c0, %c0_0] : memref<128x32xf32, #tpu.memory_space<vmem>>, vector<128x32xf32>
    %c0_1 = arith.constant 0 : index
    %c0_2 = arith.constant 0 : index
    %1 = vector.load %arg2[%c0_1, %c0_2] : memref<128x1xi32, #tpu.memory_space<vmem>>, vector<128x1xi32>
    %2 = tpu.iota {dimensions = array<i32: 0>} : vector<128x1xi32>
    %c15_i32 = arith.constant 15 : i32
    %3 = vector.broadcast %c15_i32 : i32 to vector<128x1xi32>
    %4 = arith.andi %2, %3 : vector<128x1xi32>
    %5 = arith.subi %2, %4 : vector<128x1xi32>
    %6 = arith.cmpi slt, %4, %1 : vector<128x1xi32>
    %c1_i32 = arith.constant 1 : i32
    %7 = vector.broadcast %c1_i32 : i32 to vector<128x1xi32>
    %8 = arith.maxsi %1, %7 : vector<128x1xi32>
    %9 = arith.sitofp %8 : vector<128x1xi32> to vector<128x1xf32>
    %10 = math.rsqrt %9 : vector<128x1xf32>
    %cst = arith.constant 0.000000e+00 : f32
    %11 = vector.shape_cast %6 : vector<128x1xi1> to vector<128x1xi1>
    %12 = vector.broadcast %11 : vector<128x1xi1> to vector<128x32xi1>
    %13 = vector.broadcast %cst : f32 to vector<128x32xf32>
    %14 = arith.select %12, %0, %13 : vector<128x32xi1>, vector<128x32xf32>
    %c0_i32 = arith.constant 0 : i32
    %15 = vector.broadcast %c0_i32 : i32 to vector<128x1xi32>
    %16 = arith.cmpi eq, %4, %15 : vector<128x1xi32>
    %c1_i32_3 = arith.constant 1 : i32
    %17 = tpu.dynamic_rotate %14 by %c1_i32_3 dim 0 : vector<128x32xf32>, i32 -> vector<128x32xf32>
    %cst_4 = arith.constant 0.000000e+00 : f32
    %18 = vector.shape_cast %16 : vector<128x1xi1> to vector<128x1xi1>
    %19 = vector.broadcast %18 : vector<128x1xi1> to vector<128x32xi1>
    %20 = vector.broadcast %cst_4 : f32 to vector<128x32xf32>
    %21 = arith.select %19, %20, %17 : vector<128x32xi1>, vector<128x32xf32>
    %c15_i32_5 = arith.constant 15 : i32
    %22 = vector.broadcast %c15_i32_5 : i32 to vector<128x1xi32>
    %23 = arith.cmpi eq, %4, %22 : vector<128x1xi32>
    %c127_i32 = arith.constant 127 : i32
    %24 = tpu.dynamic_rotate %14 by %c127_i32 dim 0 : vector<128x32xf32>, i32 -> vector<128x32xf32>
    %cst_6 = arith.constant 0.000000e+00 : f32
    %25 = vector.shape_cast %23 : vector<128x1xi1> to vector<128x1xi1>
    %26 = vector.broadcast %25 : vector<128x1xi1> to vector<128x32xi1>
    %27 = vector.broadcast %cst_6 : f32 to vector<128x32xf32>
    %28 = arith.select %26, %27, %24 : vector<128x32xi1>, vector<128x32xf32>
    %29 = arith.truncf %21 : vector<128x32xf32> to vector<128x32xbf16>
    %c0_7 = arith.constant 0 : index
    %c0_8 = arith.constant 0 : index
    %30 = vector.load %arg3[%c0_7, %c0_8] : memref<32x96xbf16, #tpu.memory_space<vmem>>, vector<32x96xbf16>
    %cst_9 = arith.constant dense<0.000000e+00> : vector<128x96xf32>
    %31 = tpu.matmul %29, %30, %cst_9 {dimension_numbers = #tpu.dot_dimension_numbers<[1], [0], [0], [1], [0, 0, 1, 1], [], []>} : vector<128x32xbf16>, vector<32x96xbf16>, vector<128x96xf32> -> vector<128x96xf32>
    %32 = arith.truncf %14 : vector<128x32xf32> to vector<128x32xbf16>
    %c0_10 = arith.constant 0 : index
    %c0_11 = arith.constant 0 : index
    %33 = vector.load %arg4[%c0_10, %c0_11] : memref<32x96xbf16, #tpu.memory_space<vmem>>, vector<32x96xbf16>
    %cst_12 = arith.constant dense<0.000000e+00> : vector<128x96xf32>
    %34 = tpu.matmul %32, %33, %cst_12 {dimension_numbers = #tpu.dot_dimension_numbers<[1], [0], [0], [1], [0, 0, 1, 1], [], []>} : vector<128x32xbf16>, vector<32x96xbf16>, vector<128x96xf32> -> vector<128x96xf32>
    %35 = arith.addf %31, %34 : vector<128x96xf32>
    %36 = arith.truncf %28 : vector<128x32xf32> to vector<128x32xbf16>
    %c0_13 = arith.constant 0 : index
    %c0_14 = arith.constant 0 : index
    %37 = vector.load %arg5[%c0_13, %c0_14] : memref<32x96xbf16, #tpu.memory_space<vmem>>, vector<32x96xbf16>
    %cst_15 = arith.constant dense<0.000000e+00> : vector<128x96xf32>
    %38 = tpu.matmul %36, %37, %cst_15 {dimension_numbers = #tpu.dot_dimension_numbers<[1], [0], [0], [1], [0, 0, 1, 1], [], []>} : vector<128x32xbf16>, vector<32x96xbf16>, vector<128x96xf32> -> vector<128x96xf32>
    %39 = arith.addf %35, %38 : vector<128x96xf32>
    %c0_16 = arith.constant 0 : index
    %c0_17 = arith.constant 0 : index
    %40 = vector.load %arg6[%c0_16, %c0_17] : memref<1x96xf32, #tpu.memory_space<vmem>>, vector<1x96xf32>
    %41 = vector.broadcast %40 : vector<1x96xf32> to vector<128x96xf32>
    %42 = arith.addf %39, %41 : vector<128x96xf32>
    %43 = vector.extract_strided_slice %42 {offsets = [0, 0], sizes = [128, 32], strides = [1, 1]} : vector<128x96xf32> to vector<128x32xf32>
    %44 = arith.truncf %43 : vector<128x32xf32> to vector<128x32xbf16>
    %45 = vector.extract_strided_slice %42 {offsets = [0, 32], sizes = [128, 32], strides = [1, 1]} : vector<128x96xf32> to vector<128x32xf32>
    %46 = arith.truncf %45 : vector<128x32xf32> to vector<128x32xbf16>
    %47 = vector.extract_strided_slice %42 {offsets = [0, 64], sizes = [128, 32], strides = [1, 1]} : vector<128x96xf32> to vector<128x32xf32>
    %48 = arith.truncf %47 : vector<128x32xf32> to vector<128x32xbf16>
    %cst_18 = arith.constant dense<0.000000e+00> : vector<128x128xf32>
    %49 = tpu.matmul %44, %46, %cst_18 {dimension_numbers = #tpu.dot_dimension_numbers<[1], [1], [0], [0], [0, 0, 1, 0], [], []>} : vector<128x32xbf16>, vector<128x32xbf16>, vector<128x128xf32> -> vector<128x128xf32>
    %50 = vector.broadcast %10 : vector<128x1xf32> to vector<128x128xf32>
    %51 = arith.mulf %49, %50 : vector<128x128xf32>
    %52 = tpu.iota {dimensions = array<i32: 1>} : vector<128x128xi32>
    %53 = vector.broadcast %5 : vector<128x1xi32> to vector<128x128xi32>
    %54 = arith.cmpi sge, %52, %53 : vector<128x128xi32>
    %55 = arith.addi %5, %1 : vector<128x1xi32>
    %56 = vector.broadcast %55 : vector<128x1xi32> to vector<128x128xi32>
    %57 = arith.cmpi slt, %52, %56 : vector<128x128xi32>
    %58 = arith.andi %54, %57 : vector<128x128xi1>
    %cst_19 = arith.constant -1.000000e+30 : f32
    %59 = vector.broadcast %cst_19 : f32 to vector<128x128xf32>
    %60 = arith.select %58, %51, %59 : vector<128x128xi1>, vector<128x128xf32>
    %cst_20 = arith.constant dense<0xFF800000> : vector<128xf32>
    %61 = vector.multi_reduction <maximumf>, %60, %cst_20 [1] : vector<128x128xf32> to vector<128xf32>
    %62 = vector.shape_cast %61 : vector<128xf32> to vector<128x1xf32>
    %63 = vector.broadcast %62 : vector<128x1xf32> to vector<128x128xf32>
    %64 = arith.subf %60, %63 : vector<128x128xf32>
    %65 = math.exp %64 : vector<128x128xf32>
    %cst_21 = arith.constant dense<0.000000e+00> : vector<128xf32>
    %66 = vector.multi_reduction <add>, %65, %cst_21 [1] : vector<128x128xf32> to vector<128xf32>
    %67 = vector.shape_cast %66 : vector<128xf32> to vector<128x1xf32>
    %68 = tpu.reciprocal %67 {approx = true} : vector<128x1xf32> -> vector<128x1xf32>
    %69 = vector.broadcast %68 : vector<128x1xf32> to vector<128x128xf32>
    %70 = arith.mulf %65, %69 : vector<128x128xf32>
    %71 = arith.truncf %70 : vector<128x128xf32> to vector<128x128xbf16>
    %cst_22 = arith.constant dense<0.000000e+00> : vector<128x32xf32>
    %72 = tpu.matmul %71, %48, %cst_22 {dimension_numbers = #tpu.dot_dimension_numbers<[1], [0], [0], [1], [0, 0, 1, 1], [], []>} : vector<128x128xbf16>, vector<128x32xbf16>, vector<128x32xf32> -> vector<128x32xf32>
    %c0_23 = arith.constant 0 : index
    %c0_24 = arith.constant 0 : index
    %73 = memref.load %arg7[%c0_23, %c0_24] : memref<1x1xf32, #tpu.memory_space<smem>>
    %74 = vector.broadcast %73 : f32 to vector<128x32xf32>
    %75 = arith.mulf %74, %72 : vector<128x32xf32>
    %76 = arith.addf %75, %0 : vector<128x32xf32>
    %77 = vector.shape_cast %6 : vector<128x1xi1> to vector<128x1xi1>
    %78 = vector.broadcast %77 : vector<128x1xi1> to vector<128x32xi1>
    %79 = arith.select %78, %76, %0 : vector<128x32xi1>, vector<128x32xf32>
    %c0_25 = arith.constant 0 : index
    %c0_26 = arith.constant 0 : index
    %80 = vector.load %arg8[%c0_25, %c0_26] : memref<128x32xf32, #tpu.memory_space<vmem>>, vector<128x32xf32>
    tpu.vector_store %arg8[%c0_25, %c0_26], %79 {strides = array<i32>} : memref<128x32xf32, #tpu.memory_space<vmem>>, vector<128x32xf32>,
    return
  }
  func.func @transform_0(%arg0: i32) -> (i32, i32) {
    %c0_i32 = arith.constant 0 : i32
    %c0_i32_0 = arith.constant 0 : i32
    return %arg0, %c0_i32 : i32, i32
  }
  func.func @transform_1(%arg0: i32) -> (i32, i32) {
    %c0_i32 = arith.constant 0 : i32
    %c0_i32_0 = arith.constant 0 : i32
    return %arg0, %c0_i32 : i32, i32
  }
  func.func @transform_2(%arg0: i32) -> (i32, i32) {
    %c0_i32 = arith.constant 0 : i32
    %c0_i32_0 = arith.constant 0 : i32
    %c0_i32_1 = arith.constant 0 : i32
    return %c0_i32, %c0_i32_0 : i32, i32
  }
  func.func @transform_3(%arg0: i32) -> (i32, i32) {
    %c0_i32 = arith.constant 0 : i32
    %c0_i32_0 = arith.constant 0 : i32
    %c0_i32_1 = arith.constant 0 : i32
    return %c0_i32, %c0_i32_0 : i32, i32
  }
  func.func @transform_4(%arg0: i32) -> (i32, i32) {
    %c0_i32 = arith.constant 0 : i32
    %c0_i32_0 = arith.constant 0 : i32
    %c0_i32_1 = arith.constant 0 : i32
    return %c0_i32, %c0_i32_0 : i32, i32
  }
  func.func @transform_5(%arg0: i32) -> (i32, i32) {
    %c0_i32 = arith.constant 0 : i32
    %c0_i32_0 = arith.constant 0 : i32
    %c0_i32_1 = arith.constant 0 : i32
    return %c0_i32, %c0_i32_0 : i32, i32
  }
  func.func @transform_6(%arg0: i32) -> (i32, i32) {
    %c0_i32 = arith.constant 0 : i32
    %c0_i32_0 = arith.constant 0 : i32
    %c0_i32_1 = arith.constant 0 : i32
    return %c0_i32, %c0_i32_0 : i32, i32
  }
  func.func @transform_7(%arg0: i32) -> (i32, i32) {
    %c0_i32 = arith.constant 0 : i32
    %c0_i32_0 = arith.constant 0 : i32
    return %arg0, %c0_i32 : i32, i32
  }
}

</mosaic_0001>

<llo_original>
// kernel: tpu_custom_call.1
$region0: #{tpu_custom_call.1}
  #allocation0 [shape = 'u32[]', space=smem, size = 0x4, offset = 0x4, fixed_abs, tag = 'smem constant byte address 0x4 - core index']
  #allocation1 [shape = 'u32[144,128]{1,0:T(1,128)}', space=vmem, size = 0x12000, scoped, tag = 'internal scratch']
  #allocation2 [shape = 'f32[1,1]{1,0:T(1,128)S(6)}', space=smem, size = 0x200, scoped, tag = 'scoped memory for tpu_custom_call.1']
  %s0 = inlined_call_operand.vmem [shape: f32[256,32], index: 0, kind: input, shape index: {}]
  %s1 = inlined_call_operand.vmem [shape: s32[256,1], index: 1, kind: input, shape index: {}]
  %s2 = inlined_call_operand.vmem [shape: bf16[32,96], index: 2, kind: input, shape index: {}]
  %s3 = inlined_call_operand.vmem [shape: bf16[32,96], index: 3, kind: input, shape index: {}]
  %s4 = inlined_call_operand.vmem [shape: bf16[32,96], index: 4, kind: input, shape index: {}]
  %s5 = inlined_call_operand.vmem [shape: f32[1,96], index: 5, kind: input, shape index: {}]
  %s6 = inlined_call_operand.<no memory space> [shape: f32[1,1], index: 6, kind: input, shape index: {}]
  %s7 = inlined_call_operand.vmem [shape: f32[256,32], index: 7, kind: output, shape index: {}]
  %s8 = sld [smem:[#allocation0]]
  $region61: #{tpu_custom_call.1} parent=0
    _
  %s10 = ssub.s32 1, %s8
  %s11 = scalar_select 0, %s10, %s8
  %12 = sst [smem:[#allocation2]] %s6
  loop: start=0, step=1, limit=4
  $region2: #{tpu_custom_call.1} parent=0 // loop_pre_header
    _
  $region3: #{tpu_custom_call.1} parent=0 // loop_header
    %s14 = sphi 0, %s18
    %p15 = scmp.ge.s32.totalorder %s14, 4
    %s24 = sphi 0, %s26
    %s27 = sphi 0, %s24
    %s28 = sphi 0, %s27
    %s44 = sphi 0, %s28
    %s50 = sphi 0, %s52
    %s53 = sphi 0, %s50
    %s54 = sphi 0, %s53
    %s70 = sphi 0, %s54
    %s74 = sphi 0, %s74
    %s76 = sphi 0, %s74
    %s77 = sphi 0, %s76
    %s91 = sphi 0, %s77
    %s95 = sphi 0, %s95
    %s97 = sphi 0, %s95
    %s98 = sphi 0, %s97
    %s112 = sphi 0, %s98
    %s116 = sphi 0, %s116
    %s118 = sphi 0, %s116
    %s119 = sphi 0, %s118
    %s133 = sphi 0, %s119
    %s137 = sphi 0, %s137
    %s139 = sphi 0, %s137
    %s140 = sphi 0, %s139
    %s154 = sphi 0, %s140
    %s158 = sphi 0, %s158
    %s160 = sphi 0, %s158
    %s161 = sphi 0, %s160
    %s175 = sphi 0, %s161
    %s181 = sphi 0, %s183
    %s184 = sphi 0, %s181
    %s185 = sphi 0, %s184
    %s201 = sphi 0, %s185
  $region4: #{tpu_custom_call.1} parent=0 // loop_header_branch
    %17 = sbr.rel (%p15) target = $region8
  $region5: #{tpu_custom_call.1} parent=0 // loop_body
    %s19 = ssub.s32 %s14, 1
    %s20 = ssub.s32 %s14, 2
    %s21 = sadd.s32 %s14, 1
    %s22 = ssub.s32 %s14, %s21
    %p23 = scmp.eq.s32.totalorder %s22, 0
    %s25 = sadd.s32 %s24, 1
    %s26 = scalar_select %p23, %s24, %s25
    %p29 = pneg %p23
    %p30 = scmp.eq.s32.totalorder %s14, 1
    %p31 = por %p29, %p30
    %p32 = scmp.ne.s32.totalorder %s24, %s27
    %p33 = scmp.eq.s32.totalorder %s14, 0
    %p34 = por %p32, %p33
    %p35 = scmp.ne.s32.totalorder %s24, %s27
    %p36 = scmp.eq.s32.totalorder %s19, 1
    %p37 = por %p35, %p36
    %p38 = scmp.ne.s32.totalorder %s27, %s28
    %p39 = scmp.eq.s32.totalorder %s19, 0
    %p40 = por %p38, %p39
    %p41 = scmp.ne.s32.totalorder %s27, %s28
    %p42 = scmp.eq.s32.totalorder %s20, 1
    %p43 = por %p41, %p42
    %p45 = scmp.ne.s32.totalorder %s28, %s44
    %p46 = scmp.eq.s32.totalorder %s20, 0
    %p47 = por %p45, %p46
    %s48 = ssub.s32 %s14, %s21
    %p49 = scmp.eq.s32.totalorder %s48, 0
    %s51 = sadd.s32 %s50, 1
    %s52 = scalar_select %p49, %s50, %s51
    %p55 = pneg %p49
    %p56 = scmp.eq.s32.totalorder %s14, 1
    %p57 = por %p55, %p56
    %p58 = scmp.ne.s32.totalorder %s50, %s53
    %p59 = scmp.eq.s32.totalorder %s14, 0
    %p60 = por %p58, %p59
    %p61 = scmp.ne.s32.totalorder %s50, %s53
    %p62 = scmp.eq.s32.totalorder %s19, 1
    %p63 = por %p61, %p62
    %p64 = scmp.ne.s32.totalorder %s53, %s54
    %p65 = scmp.eq.s32.totalorder %s19, 0
    %p66 = por %p64, %p65
    %p67 = scmp.ne.s32.totalorder %s53, %s54
    %p68 = scmp.eq.s32.totalorder %s20, 1
    %p69 = por %p67, %p68
    %p71 = scmp.ne.s32.totalorder %s54, %s70
    %p72 = scmp.eq.s32.totalorder %s20, 0
    %p73 = por %p71, %p72
    %s75 = sadd.s32 %s74, 1
    %p78 = scmp.eq.s32.totalorder %s14, 1
    %p79 = scmp.ne.s32.totalorder %s74, %s76
    %p80 = scmp.eq.s32.totalorder %s14, 0
    %p81 = por %p79, %p80
    %p82 = scmp.ne.s32.totalorder %s74, %s76
    %p83 = scmp.eq.s32.totalorder %s19, 1
    %p84 = por %p82, %p83
    %p85 = scmp.ne.s32.totalorder %s76, %s77
    %p86 = scmp.eq.s32.totalorder %s19, 0
    %p87 = por %p85, %p86
    %p88 = scmp.ne.s32.totalorder %s76, %s77
    %p89 = scmp.eq.s32.totalorder %s20, 1
    %p90 = por %p88, %p89
    %p92 = scmp.ne.s32.totalorder %s77, %s91
    %p93 = scmp.eq.s32.totalorder %s20, 0
    %p94 = por %p92, %p93
    %s96 = sadd.s32 %s95, 1
    %p99 = scmp.eq.s32.totalorder %s14, 1
    %p100 = scmp.ne.s32.totalorder %s95, %s97
    %p101 = scmp.eq.s32.totalorder %s14, 0
    %p102 = por %p100, %p101
    %p103 = scmp.ne.s32.totalorder %s95, %s97
    %p104 = scmp.eq.s32.totalorder %s19, 1
    %p105 = por %p103, %p104
    %p106 = scmp.ne.s32.totalorder %s97, %s98
    %p107 = scmp.eq.s32.totalorder %s19, 0
    %p108 = por %p106, %p107
    %p109 = scmp.ne.s32.totalorder %s97, %s98
    %p110 = scmp.eq.s32.totalorder %s20, 1
    %p111 = por %p109, %p110
    %p113 = scmp.ne.s32.totalorder %s98, %s112
    %p114 = scmp.eq.s32.totalorder %s20, 0
    %p115 = por %p113, %p114
    %s117 = sadd.s32 %s116, 1
    %p120 = scmp.eq.s32.totalorder %s14, 1
    %p121 = scmp.ne.s32.totalorder %s116, %s118
    %p122 = scmp.eq.s32.totalorder %s14, 0
    %p123 = por %p121, %p122
    %p124 = scmp.ne.s32.totalorder %s116, %s118
    %p125 = scmp.eq.s32.totalorder %s19, 1
    %p126 = por %p124, %p125
    %p127 = scmp.ne.s32.totalorder %s118, %s119
    %p128 = scmp.eq.s32.totalorder %s19, 0
    %p129 = por %p127, %p128
    %p130 = scmp.ne.s32.totalorder %s118, %s119
    %p131 = scmp.eq.s32.totalorder %s20, 1
    %p132 = por %p130, %p131
    %p134 = scmp.ne.s32.totalorder %s119, %s133
    %p135 = scmp.eq.s32.totalorder %s20, 0
    %p136 = por %p134, %p135
    %s138 = sadd.s32 %s137, 1
    %p141 = scmp.eq.s32.totalorder %s14, 1
    %p142 = scmp.ne.s32.totalorder %s137, %s139
    %p143 = scmp.eq.s32.totalorder %s14, 0
    %p144 = por %p142, %p143
    %p145 = scmp.ne.s32.totalorder %s137, %s139
    %p146 = scmp.eq.s32.totalorder %s19, 1
    %p147 = por %p145, %p146
    %p148 = scmp.ne.s32.totalorder %s139, %s140
    %p149 = scmp.eq.s32.totalorder %s19, 0
    %p150 = por %p148, %p149
    %p151 = scmp.ne.s32.totalorder %s139, %s140
    %p152 = scmp.eq.s32.totalorder %s20, 1
    %p153 = por %p151, %p152
    %p155 = scmp.ne.s32.totalorder %s140, %s154
    %p156 = scmp.eq.s32.totalorder %s20, 0
    %p157 = por %p155, %p156
    %s159 = sadd.s32 %s158, 1
    %p162 = scmp.eq.s32.totalorder %s14, 1
    %p163 = scmp.ne.s32.totalorder %s158, %s160
    %p164 = scmp.eq.s32.totalorder %s14, 0
    %p165 = por %p163, %p164
    %p166 = scmp.ne.s32.totalorder %s158, %s160
    %p167 = scmp.eq.s32.totalorder %s19, 1
    %p168 = por %p166, %p167
    %p169 = scmp.ne.s32.totalorder %s160, %s161
    %p170 = scmp.eq.s32.totalorder %s19, 0
    %p171 = por %p169, %p170
    %p172 = scmp.ne.s32.totalorder %s160, %s161
    %p173 = scmp.eq.s32.totalorder %s20, 1
    %p174 = por %p172, %p173
    %p176 = scmp.ne.s32.totalorder %s161, %s175
    %p177 = scmp.eq.s32.totalorder %s20, 0
    %p178 = por %p176, %p177
    %s179 = ssub.s32 %s14, %s21
    %p180 = scmp.eq.s32.totalorder %s179, 0
    %s182 = sadd.s32 %s181, 1
    %s183 = scalar_select %p180, %s181, %s182
    %p186 = pneg %p180
    %p187 = scmp.eq.s32.totalorder %s14, 1
    %p188 = por %p186, %p187
    %p189 = scmp.ne.s32.totalorder %s181, %s184
    %p190 = scmp.eq.s32.totalorder %s14, 0
    %p191 = por %p189, %p190
    %p192 = scmp.ne.s32.totalorder %s181, %s184
    %p193 = scmp.eq.s32.totalorder %s19, 1
    %p194 = por %p192, %p193
    %p195 = scmp.ne.s32.totalorder %s184, %s185
    %p196 = scmp.eq.s32.totalorder %s19, 0
    %p197 = por %p195, %p196
    %p198 = scmp.ne.s32.totalorder %s184, %s185
    %p199 = scmp.eq.s32.totalorder %s20, 1
    %p200 = por %p198, %p199
    %p202 = scmp.ne.s32.totalorder %s185, %s201
    %p203 = scmp.eq.s32.totalorder %s20, 0
    %p204 = por %p202, %p203
    %p205 = scmp.le.s32.totalorder 1, %s14
    %p206 = scmp.lt.s32.totalorder %s14, 3
    %p207 = pnand %p205, %p206
    %p208 = pneg %p207
    // Predicated region
    $region9: #{tpu_custom_call.1} parent=5 // pred_check
      _
    $region10: #{tpu_custom_call.1} parent=5 // pred_check_branch
      %210 = sbr.rel (%p207) target = $region12
    $region11: #{tpu_custom_call.1} parent=5 // pred_region
      %s211 = ssub.s32 %s14, 1
      // Predicated region
      $region13: #{tpu_custom_call.1} parent=11 // pred_check
        %p212 = pneg %p87
      $region14: #{tpu_custom_call.1} parent=11 // pred_check_branch
        %214 = sbr.rel (%p212) target = $region16
      $region15: #{tpu_custom_call.1} parent=11 // pred_region
        _
      $region16: #{tpu_custom_call.1} parent=11 // pred_fallthru
        _
      // Predicated region
      $region17: #{tpu_custom_call.1} parent=11 // pred_check
        %p215 = pneg %p108
      $region18: #{tpu_custom_call.1} parent=11 // pred_check_branch
        %217 = sbr.rel (%p215) target = $region20
      $region19: #{tpu_custom_call.1} parent=11 // pred_region
        _
      $region20: #{tpu_custom_call.1} parent=11 // pred_fallthru
        _
      // Predicated region
      $region21: #{tpu_custom_call.1} parent=11 // pred_check
        %p218 = pneg %p129
      $region22: #{tpu_custom_call.1} parent=11 // pred_check_branch
        %220 = sbr.rel (%p218) target = $region24
      $region23: #{tpu_custom_call.1} parent=11 // pred_region
        _
      $region24: #{tpu_custom_call.1} parent=11 // pred_fallthru
        _
      // Predicated region
      $region25: #{tpu_custom_call.1} parent=11 // pred_check
        %p221 = pneg %p150
      $region26: #{tpu_custom_call.1} parent=11 // pred_check_branch
        %223 = sbr.rel (%p221) target = $region28
      $region27: #{tpu_custom_call.1} parent=11 // pred_region
        _
      $region28: #{tpu_custom_call.1} parent=11 // pred_fallthru
        _
      // Predicated region
      $region29: #{tpu_custom_call.1} parent=11 // pred_check
        %p224 = pneg %p171
      $region30: #{tpu_custom_call.1} parent=11 // pred_check_branch
        %226 = sbr.rel (%p224) target = $region32
      $region31: #{tpu_custom_call.1} parent=11 // pred_region
        _
      $region32: #{tpu_custom_call.1} parent=11 // pred_fallthru
        _
    $region12: #{tpu_custom_call.1} parent=5 // pred_fallthru
      _
    %p227 = scmp.lt.s32.totalorder %s14, 2
    // Predicated region
    $region33: #{tpu_custom_call.1} parent=5 // pred_check
      %p228 = pneg %p227
    $region34: #{tpu_custom_call.1} parent=5 // pred_check_branch
      %230 = sbr.rel (%p228) target = $region36
    $region35: #{tpu_custom_call.1} parent=5 // pred_region
      // Predicated region
      $region37: #{tpu_custom_call.1} parent=35 // pred_check
        %p231 = pneg %p34
      $region38: #{tpu_custom_call.1} parent=35 // pred_check_branch
        %233 = sbr.rel (%p231) target = $region40
      $region39: #{tpu_custom_call.1} parent=35 // pred_region
        %s234 = smul.u32 16, %s14
        %p235 = scmp.lt.s32.totalorder %s234, 31
        %s236 = scalar_select %p235, %s234, 31
        %s237 = smul.addr %s236, 8
        %s238 = scalar_lea.vmem %s0, %s237
        %s239 = smul.u32 16, %s14
      $region40: #{tpu_custom_call.1} parent=35 // pred_fallthru
        _
      // Predicated region
      $region41: #{tpu_custom_call.1} parent=35 // pred_check
        %p240 = pneg %p60
      $region42: #{tpu_custom_call.1} parent=35 // pred_check_branch
        %242 = sbr.rel (%p240) target = $region44
      $region43: #{tpu_custom_call.1} parent=35 // pred_region
        %s243 = smul.u32 16, %s14
        %p244 = scmp.lt.s32.totalorder %s243, 31
        %s245 = scalar_select %p244, %s243, 31
        %s246 = smul.addr %s245, 8
        %s247 = scalar_lea.vmem %s1, %s246
        %s248 = smul.u32 16, %s14
      $region44: #{tpu_custom_call.1} parent=35 // pred_fallthru
        _
    $region36: #{tpu_custom_call.1} parent=5 // pred_fallthru
      _
    %p249 = scmp.le.s32.totalorder 1, %s14
    %p250 = scmp.lt.s32.totalorder %s14, 3
    %p251 = pnand %p249, %p250
    %p252 = pneg %p251
    // Predicated region
    $region45: #{tpu_custom_call.1} parent=5 // pred_check
      _
    $region46: #{tpu_custom_call.1} parent=5 // pred_check_branch
      %254 = sbr.rel (%p251) target = $region48
    $region47: #{tpu_custom_call.1} parent=5 // pred_region
      %s255 = ssub.s32 %s14, 1
      %s256 = smul.u32 16, %s19
      %p257 = scmp.lt.s32.totalorder %s256, 31
      %s258 = scalar_select %p257, %s256, 31
      %s259 = smul.addr %s258, 8
      %s260 = scalar_lea.vmem %s0, %s259
      %p261 = pneg %p40
      %p262 = pneg %p37
      %s263 = smul.u32 16, %s19
      %p264 = scmp.lt.s32.totalorder %s263, 31
      %s265 = scalar_select %p264, %s263, 31
      %s266 = smul.addr %s265, 8
      %s267 = scalar_lea.vmem %s1, %s266
      %p268 = pneg %p66
      %p269 = pneg %p63
      %p270 = pneg %p87
      %p271 = pneg %p84
      %p272 = pneg %p108
      %p273 = pneg %p105
      %p274 = pneg %p129
      %p275 = pneg %p126
      %p276 = pneg %p150
      %p277 = pneg %p147
      %p278 = pneg %p171
      %p279 = pneg %p168
      %p280 = pneg %p197
      %p281 = pneg %p194
      %s282 = smul.u32 16, %s19
      %p283 = scmp.lt.s32.totalorder %s282, 31
      %s284 = scalar_select %p283, %s282, 31
      %s285 = smul.addr %s284, 8
      %s286 = scalar_lea.vmem %s7, %s285
      %s287 = smul.u32 16, %s19
      %p288 = scmp.lt.s32.totalorder %s287, 31
      %s289 = scalar_select %p288, %s287, 31
      %s290 = smul.addr %s289, 8
      %s291 = scalar_lea.vmem %s0, %s290
      %s292 = smul.u32 16, %s19
      %s293 = smul.u32 16, %s19
      %p294 = scmp.lt.s32.totalorder %s293, 31
      %s295 = scalar_select %p294, %s293, 31
      %s296 = smul.addr %s295, 8
      %s297 = scalar_lea.vmem %s1, %s296
      %s298 = smul.u32 16, %s19
      %s299 = smul.u32 16, %s19
      %p300 = scmp.lt.s32.totalorder %s299, 31
      %s301 = scalar_select %p300, %s299, 31
      %s302 = smul.addr %s301, 8
      %s303 = scalar_lea.vmem %s7, %s302
      %s304 = smul.u32 16, %s19
      %v306 = vld [vmem:[%s291] sm:$0xff]
      %v307 = vld [vmem:[%s291 + $0x8] sm:$0xff]
      %v308 = vld [vmem:[%s291 + $0x10] sm:$0xff]
      %v309 = vld [vmem:[%s291 + $0x18] sm:$0xff]
      %v310 = vld [vmem:[%s291 + $0x20] sm:$0xff]
      %v311 = vld [vmem:[%s291 + $0x28] sm:$0xff]
      %v312 = vld [vmem:[%s291 + $0x30] sm:$0xff]
      %v313 = vld [vmem:[%s291 + $0x38] sm:$0xff]
      %v314 = vld [vmem:[%s291 + $0x40] sm:$0xff]
      %v315 = vld [vmem:[%s291 + $0x48] sm:$0xff]
      %v316 = vld [vmem:[%s291 + $0x50] sm:$0xff]
      %v317 = vld [vmem:[%s291 + $0x58] sm:$0xff]
      %v318 = vld [vmem:[%s291 + $0x60] sm:$0xff]
      %v319 = vld [vmem:[%s291 + $0x68] sm:$0xff]
      %v320 = vld [vmem:[%s291 + $0x70] sm:$0xff]
      %v321 = vld [vmem:[%s291 + $0x78] sm:$0xff]
      %v322 = vld [vmem:[%s297] sm:$0xff]
      %v323 = vld [vmem:[%s297 + $0x8] sm:$0xff]
      %v324 = vld [vmem:[%s297 + $0x10] sm:$0xff]
      %v325 = vld [vmem:[%s297 + $0x18] sm:$0xff]
      %v326 = vld [vmem:[%s297 + $0x20] sm:$0xff]
      %v327 = vld [vmem:[%s297 + $0x28] sm:$0xff]
      %v328 = vld [vmem:[%s297 + $0x30] sm:$0xff]
      %v329 = vld [vmem:[%s297 + $0x38] sm:$0xff]
      %v330 = vld [vmem:[%s297 + $0x40] sm:$0xff]
      %v331 = vld [vmem:[%s297 + $0x48] sm:$0xff]
      %v332 = vld [vmem:[%s297 + $0x50] sm:$0xff]
      %v333 = vld [vmem:[%s297 + $0x58] sm:$0xff]
      %v334 = vld [vmem:[%s297 + $0x60] sm:$0xff]
      %v335 = vld [vmem:[%s297 + $0x68] sm:$0xff]
      %v336 = vld [vmem:[%s297 + $0x70] sm:$0xff]
      %v337 = vld [vmem:[%s297 + $0x78] sm:$0xff]
      %v338 = vlaneseq
      %v339 = vshrl.u32 %v338, 7
      %v340 = vadd.s32 %v339, 8
      %v341 = vadd.s32 %v339, 16
      %v342 = vadd.s32 %v339, 24
      %v343 = vadd.s32 %v339, 32
      %v344 = vadd.s32 %v339, 40
      %v345 = vadd.s32 %v339, 48
      %v346 = vadd.s32 %v339, 56
      %v347 = vadd.s32 %v339, 64
      %v348 = vadd.s32 %v339, 72
      %v349 = vadd.s32 %v339, 80
      %v350 = vadd.s32 %v339, 88
      %v351 = vadd.s32 %v339, 96
      %v352 = vadd.s32 %v339, 104
      %v353 = vadd.s32 %v339, 112
      %v354 = vadd.s32 %v339, 120
      %v355 = vand.u32 %v339, 15
      %v356 = vand.u32 %v340, 15
      %v357 = vand.u32 %v341, 15
      %v358 = vand.u32 %v342, 15
      %v359 = vand.u32 %v343, 15
      %v360 = vand.u32 %v344, 15
      %v361 = vand.u32 %v345, 15
      %v362 = vand.u32 %v346, 15
      %v363 = vand.u32 %v347, 15
      %v364 = vand.u32 %v348, 15
      %v365 = vand.u32 %v349, 15
      %v366 = vand.u32 %v350, 15
      %v367 = vand.u32 %v351, 15
      %v368 = vand.u32 %v352, 15
      %v369 = vand.u32 %v353, 15
      %v370 = vand.u32 %v354, 15
      %v371 = vsub.s32 %v339, %v355
      %v372 = vsub.s32 %v340, %v356
      %v373 = vsub.s32 %v341, %v357
      %v374 = vsub.s32 %v342, %v358
      %v375 = vsub.s32 %v343, %v359
      %v376 = vsub.s32 %v344, %v360
      %v377 = vsub.s32 %v345, %v361
      %v378 = vsub.s32 %v346, %v362
      %v379 = vsub.s32 %v347, %v363
      %v380 = vsub.s32 %v348, %v364
      %v381 = vsub.s32 %v349, %v365
      %v382 = vsub.s32 %v350, %v366
      %v383 = vsub.s32 %v351, %v367
      %v384 = vsub.s32 %v352, %v368
      %v385 = vsub.s32 %v353, %v369
      %v386 = vsub.s32 %v354, %v370
      %vm387 = vcmp.lt.s32.totalorder %v355, %v322
      %vm388 = vcmp.lt.s32.totalorder %v356, %v323
      %vm389 = vcmp.lt.s32.totalorder %v357, %v324
      %vm390 = vcmp.lt.s32.totalorder %v358, %v325
      %vm391 = vcmp.lt.s32.totalorder %v359, %v326
      %vm392 = vcmp.lt.s32.totalorder %v360, %v327
      %vm393 = vcmp.lt.s32.totalorder %v361, %v328
      %vm394 = vcmp.lt.s32.totalorder %v362, %v329
      %vm395 = vcmp.lt.s32.totalorder %v363, %v330
      %vm396 = vcmp.lt.s32.totalorder %v364, %v331
      %vm397 = vcmp.lt.s32.totalorder %v365, %v332
      %vm398 = vcmp.lt.s32.totalorder %v366, %v333
      %vm399 = vcmp.lt.s32.totalorder %v367, %v334
      %vm400 = vcmp.lt.s32.totalorder %v368, %v335
      %vm401 = vcmp.lt.s32.totalorder %v369, %v336
      %vm402 = vcmp.lt.s32.totalorder %v370, %v337
      %vm403 = vcmp.gt.s32.totalorder %v322, 1
      %v404 = vsel %vm403, %v322, 1
      %vm405 = vcmp.gt.s32.totalorder %v323, 1
      %v406 = vsel %vm405, %v323, 1
      %vm407 = vcmp.gt.s32.totalorder %v324, 1
      %v408 = vsel %vm407, %v324, 1
      %vm409 = vcmp.gt.s32.totalorder %v325, 1
      %v410 = vsel %vm409, %v325, 1
      %vm411 = vcmp.gt.s32.totalorder %v326, 1
      %v412 = vsel %vm411, %v326, 1
      %vm413 = vcmp.gt.s32.totalorder %v327, 1
      %v414 = vsel %vm413, %v327, 1
      %vm415 = vcmp.gt.s32.totalorder %v328, 1
      %v416 = vsel %vm415, %v328, 1
      %vm417 = vcmp.gt.s32.totalorder %v329, 1
      %v418 = vsel %vm417, %v329, 1
      %vm419 = vcmp.gt.s32.totalorder %v330, 1
      %v420 = vsel %vm419, %v330, 1
      %vm421 = vcmp.gt.s32.totalorder %v331, 1
      %v422 = vsel %vm421, %v331, 1
      %vm423 = vcmp.gt.s32.totalorder %v332, 1
      %v424 = vsel %vm423, %v332, 1
      %vm425 = vcmp.gt.s32.totalorder %v333, 1
      %v426 = vsel %vm425, %v333, 1
      %vm427 = vcmp.gt.s32.totalorder %v334, 1
      %v428 = vsel %vm427, %v334, 1
      %vm429 = vcmp.gt.s32.totalorder %v335, 1
      %v430 = vsel %vm429, %v335, 1
      %vm431 = vcmp.gt.s32.totalorder %v336, 1
      %v432 = vsel %vm431, %v336, 1
      %vm433 = vcmp.gt.s32.totalorder %v337, 1
      %v434 = vsel %vm433, %v337, 1
      %v435 = vcvt.s32.f32 %v404
      %v436 = vcvt.s32.f32 %v406
      %v437 = vcvt.s32.f32 %v408
      %v438 = vcvt.s32.f32 %v410
      %v439 = vcvt.s32.f32 %v412
      %v440 = vcvt.s32.f32 %v414
      %v441 = vcvt.s32.f32 %v416
      %v442 = vcvt.s32.f32 %v418
      %v443 = vcvt.s32.f32 %v420
      %v444 = vcvt.s32.f32 %v422
      %v445 = vcvt.s32.f32 %v424
      %v446 = vcvt.s32.f32 %v426
      %v447 = vcvt.s32.f32 %v428
      %v448 = vcvt.s32.f32 %v430
      %v449 = vcvt.s32.f32 %v432
      %v450 = vcvt.s32.f32 %v434
      %v451 = vrsqrt.pop %v435
      %v452 = vrsqrt.pop %v436
      %v453 = vrsqrt.pop %v437
      %v454 = vrsqrt.pop %v438
      %v455 = vrsqrt.pop %v439
      %v456 = vrsqrt.pop %v440
      %v457 = vrsqrt.pop %v441
      %v458 = vrsqrt.pop %v442
      %v459 = vrsqrt.pop %v443
      %v460 = vrsqrt.pop %v444
      %v461 = vrsqrt.pop %v445
      %v462 = vrsqrt.pop %v446
      %v463 = vrsqrt.pop %v447
      %v464 = vrsqrt.pop %v448
      %v465 = vrsqrt.pop %v449
      %v466 = vrsqrt.pop %v450
      %v467 = vsel %vm387, 1, 0
      %v468 = vsel %vm388, 1, 0
      %v469 = vsel %vm389, 1, 0
      %v470 = vsel %vm390, 1, 0
      %v471 = vsel %vm391, 1, 0
      %v472 = vsel %vm392, 1, 0
      %v473 = vsel %vm393, 1, 0
      %v474 = vsel %vm394, 1, 0
      %v475 = vsel %vm395, 1, 0
      %v476 = vsel %vm396, 1, 0
      %v477 = vsel %vm397, 1, 0
      %v478 = vsel %vm398, 1, 0
      %v479 = vsel %vm399, 1, 0
      %v480 = vsel %vm400, 1, 0
      %v481 = vsel %vm401, 1, 0
      %v482 = vsel %vm402, 1, 0
      %483 = vset.pattern.permute.xlu0 0
      %484 = vperm.xlu0 %483, %v467
      %v485 = vpop.permute.xlu0 %484
      %486 = vset.pattern.permute.xlu0 0
      %487 = vperm.xlu0 %486, %v468
      %v488 = vpop.permute.xlu0 %487
      %489 = vset.pattern.permute.xlu0 0
      %490 = vperm.xlu0 %489, %v469
      %v491 = vpop.permute.xlu0 %490
      %492 = vset.pattern.permute.xlu0 0
      %493 = vperm.xlu0 %492, %v470
      %v494 = vpop.permute.xlu0 %493
      %495 = vset.pattern.permute.xlu0 0
      %496 = vperm.xlu0 %495, %v471
      %v497 = vpop.permute.xlu0 %496
      %498 = vset.pattern.permute.xlu0 0
      %499 = vperm.xlu0 %498, %v472
      %v500 = vpop.permute.xlu0 %499
      %501 = vset.pattern.permute.xlu0 0
      %502 = vperm.xlu0 %501, %v473
      %v503 = vpop.permute.xlu0 %502
      %504 = vset.pattern.permute.xlu0 0
      %505 = vperm.xlu0 %504, %v474
      %v506 = vpop.permute.xlu0 %505
      %507 = vset.pattern.permute.xlu0 0
      %508 = vperm.xlu0 %507, %v475
      %v509 = vpop.permute.xlu0 %508
      %510 = vset.pattern.permute.xlu0 0
      %511 = vperm.xlu0 %510, %v476
      %v512 = vpop.permute.xlu0 %511
      %513 = vset.pattern.permute.xlu0 0
      %514 = vperm.xlu0 %513, %v477
      %v515 = vpop.permute.xlu0 %514
      %516 = vset.pattern.permute.xlu0 0
      %517 = vperm.xlu0 %516, %v478
      %v518 = vpop.permute.xlu0 %517
      %519 = vset.pattern.permute.xlu0 0
      %520 = vperm.xlu0 %519, %v479
      %v521 = vpop.permute.xlu0 %520
      %522 = vset.pattern.permute.xlu0 0
      %523 = vperm.xlu0 %522, %v480
      %v524 = vpop.permute.xlu0 %523
      %525 = vset.pattern.permute.xlu0 0
      %526 = vperm.xlu0 %525, %v481
      %v527 = vpop.permute.xlu0 %526
      %528 = vset.pattern.permute.xlu0 0
      %529 = vperm.xlu0 %528, %v482
      %v530 = vpop.permute.xlu0 %529
      %vm531 = vcmp.eq.s32.totalorder %v485, 1
      %vm532 = vcmp.eq.s32.totalorder %v488, 1
      %vm533 = vcmp.eq.s32.totalorder %v491, 1
      %vm534 = vcmp.eq.s32.totalorder %v494, 1
      %vm535 = vcmp.eq.s32.totalorder %v497, 1
      %vm536 = vcmp.eq.s32.totalorder %v500, 1
      %vm537 = vcmp.eq.s32.totalorder %v503, 1
      %vm538 = vcmp.eq.s32.totalorder %v506, 1
      %vm539 = vcmp.eq.s32.totalorder %v509, 1
      %vm540 = vcmp.eq.s32.totalorder %v512, 1
      %vm541 = vcmp.eq.s32.totalorder %v515, 1
      %vm542 = vcmp.eq.s32.totalorder %v518, 1
      %vm543 = vcmp.eq.s32.totalorder %v521, 1
      %vm544 = vcmp.eq.s32.totalorder %v524, 1
      %vm545 = vcmp.eq.s32.totalorder %v527, 1
      %vm546 = vcmp.eq.s32.totalorder %v530, 1
      %v547 = vsel %vm531, %v306, 0.0
      %v548 = vsel %vm532, %v307, 0.0
      %v549 = vsel %vm533, %v308, 0.0
      %v550 = vsel %vm534, %v309, 0.0
      %v551 = vsel %vm535, %v310, 0.0
      %v552 = vsel %vm536, %v311, 0.0
      %v553 = vsel %vm537, %v312, 0.0
      %v554 = vsel %vm538, %v313, 0.0
      %v555 = vsel %vm539, %v314, 0.0
      %v556 = vsel %vm540, %v315, 0.0
      %v557 = vsel %vm541, %v316, 0.0
      %v558 = vsel %vm542, %v317, 0.0
      %v559 = vsel %vm543, %v318, 0.0
      %v560 = vsel %vm544, %v319, 0.0
      %v561 = vsel %vm545, %v320, 0.0
      %v562 = vsel %vm546, %v321, 0.0
      %vm563 = vcmp.eq.s32.totalorder %v355, 0
      %vm564 = vcmp.eq.s32.totalorder %v356, 0
      %vm565 = vcmp.eq.s32.totalorder %v357, 0
      %vm566 = vcmp.eq.s32.totalorder %v358, 0
      %vm567 = vcmp.eq.s32.totalorder %v359, 0
      %vm568 = vcmp.eq.s32.totalorder %v360, 0
      %vm569 = vcmp.eq.s32.totalorder %v361, 0
      %vm570 = vcmp.eq.s32.totalorder %v362, 0
      %vm571 = vcmp.eq.s32.totalorder %v363, 0
      %vm572 = vcmp.eq.s32.totalorder %v364, 0
      %vm573 = vcmp.eq.s32.totalorder %v365, 0
      %vm574 = vcmp.eq.s32.totalorder %v366, 0
      %vm575 = vcmp.eq.s32.totalorder %v367, 0
      %vm576 = vcmp.eq.s32.totalorder %v368, 0
      %vm577 = vcmp.eq.s32.totalorder %v369, 0
      %vm578 = vcmp.eq.s32.totalorder %v370, 0
      %v579 = vrot.slane %v547, 7
      %v580 = vrot.slane %v548, 7
      %v581 = vrot.slane %v549, 7
      %v582 = vrot.slane %v550, 7
      %v583 = vrot.slane %v551, 7
      %v584 = vrot.slane %v552, 7
      %v585 = vrot.slane %v553, 7
      %v586 = vrot.slane %v554, 7
      %v587 = vrot.slane %v555, 7
      %v588 = vrot.slane %v556, 7
      %v589 = vrot.slane %v557, 7
      %v590 = vrot.slane %v558, 7
      %v591 = vrot.slane %v559, 7
      %v592 = vrot.slane %v560, 7
      %v593 = vrot.slane %v561, 7
      %v594 = vrot.slane %v562, 7
      %vm595 = vcmp.lt.s32.totalorder %v339, 1
      %v596 = vsel %vm595, %v593, %v594
      %v597 = vsel %vm595, %v592, %v593
      %v598 = vsel %vm595, %v591, %v592
      %v599 = vsel %vm595, %v590, %v591
      %v600 = vsel %vm595, %v589, %v590
      %v601 = vsel %vm595, %v588, %v589
      %v602 = vsel %vm595, %v587, %v588
      %v603 = vsel %vm595, %v586, %v587
      %v604 = vsel %vm595, %v585, %v586
      %v605 = vsel %vm595, %v584, %v585
      %v606 = vsel %vm595, %v583, %v584
      %v607 = vsel %vm595, %v582, %v583
      %v608 = vsel %vm595, %v581, %v582
      %v609 = vsel %vm595, %v580, %v581
      %v610 = vsel %vm595, %v579, %v580
      %v611 = vsel %vm595, %v594, %v579
      %v612 = vsel %vm563, 1, 0
      %v613 = vsel %vm564, 1, 0
      %v614 = vsel %vm565, 1, 0
      %v615 = vsel %vm566, 1, 0
      %v616 = vsel %vm567, 1, 0
      %v617 = vsel %vm568, 1, 0
      %v618 = vsel %vm569, 1, 0
      %v619 = vsel %vm570, 1, 0
      %v620 = vsel %vm571, 1, 0
      %v621 = vsel %vm572, 1, 0
      %v622 = vsel %vm573, 1, 0
      %v623 = vsel %vm574, 1, 0
      %v624 = vsel %vm575, 1, 0
      %v625 = vsel %vm576, 1, 0
      %v626 = vsel %vm577, 1, 0
      %v627 = vsel %vm578, 1, 0
      %vm628 = vcmp.eq.s32.totalorder %v612, 1
      %vm629 = vcmp.eq.s32.totalorder %v613, 1
      %vm630 = vcmp.eq.s32.totalorder %v614, 1
      %vm631 = vcmp.eq.s32.totalorder %v615, 1
      %vm632 = vcmp.eq.s32.totalorder %v616, 1
      %vm633 = vcmp.eq.s32.totalorder %v617, 1
      %vm634 = vcmp.eq.s32.totalorder %v618, 1
      %vm635 = vcmp.eq.s32.totalorder %v619, 1
      %vm636 = vcmp.eq.s32.totalorder %v620, 1
      %vm637 = vcmp.eq.s32.totalorder %v621, 1
      %vm638 = vcmp.eq.s32.totalorder %v622, 1
      %vm639 = vcmp.eq.s32.totalorder %v623, 1
      %vm640 = vcmp.eq.s32.totalorder %v624, 1
      %vm641 = vcmp.eq.s32.totalorder %v625, 1
      %vm642 = vcmp.eq.s32.totalorder %v626, 1
      %vm643 = vcmp.eq.s32.totalorder %v627, 1
      %v644 = vsel %vm628, 0.0, %v611
      %v645 = vsel %vm629, 0.0, %v610
      %v646 = vsel %vm630, 0.0, %v609
      %v647 = vsel %vm631, 0.0, %v608
      %v648 = vsel %vm632, 0.0, %v607
      %v649 = vsel %vm633, 0.0, %v606
      %v650 = vsel %vm634, 0.0, %v605
      %v651 = vsel %vm635, 0.0, %v604
      %v652 = vsel %vm636, 0.0, %v603
      %v653 = vsel %vm637, 0.0, %v602
      %v654 = vsel %vm638, 0.0, %v601
      %v655 = vsel %vm639, 0.0, %v600
      %v656 = vsel %vm640, 0.0, %v599
      %v657 = vsel %vm641, 0.0, %v598
      %v658 = vsel %vm642, 0.0, %v597
      %v659 = vsel %vm643, 0.0, %v596
      %vm660 = vcmp.eq.s32.totalorder %v355, 15
      %vm661 = vcmp.eq.s32.totalorder %v356, 15
      %vm662 = vcmp.eq.s32.totalorder %v357, 15
      %vm663 = vcmp.eq.s32.totalorder %v358, 15
      %vm664 = vcmp.eq.s32.totalorder %v359, 15
      %vm665 = vcmp.eq.s32.totalorder %v360, 15
      %vm666 = vcmp.eq.s32.totalorder %v361, 15
      %vm667 = vcmp.eq.s32.totalorder %v362, 15
      %vm668 = vcmp.eq.s32.totalorder %v363, 15
      %vm669 = vcmp.eq.s32.totalorder %v364, 15
      %vm670 = vcmp.eq.s32.totalorder %v365, 15
      %vm671 = vcmp.eq.s32.totalorder %v366, 15
      %vm672 = vcmp.eq.s32.totalorder %v367, 15
      %vm673 = vcmp.eq.s32.totalorder %v368, 15
      %vm674 = vcmp.eq.s32.totalorder %v369, 15
      %vm675 = vcmp.eq.s32.totalorder %v370, 15
      %v676 = vrot.slane %v547, 1
      %v677 = vrot.slane %v548, 1
      %v678 = vrot.slane %v549, 1
      %v679 = vrot.slane %v550, 1
      %v680 = vrot.slane %v551, 1
      %v681 = vrot.slane %v552, 1
      %v682 = vrot.slane %v553, 1
      %v683 = vrot.slane %v554, 1
      %v684 = vrot.slane %v555, 1
      %v685 = vrot.slane %v556, 1
      %v686 = vrot.slane %v557, 1
      %v687 = vrot.slane %v558, 1
      %v688 = vrot.slane %v559, 1
      %v689 = vrot.slane %v560, 1
      %v690 = vrot.slane %v561, 1
      %v691 = vrot.slane %v562, 1
      %vm692 = vcmp.lt.s32.totalorder %v339, 7
      %v693 = vsel %vm692, %v690, %v691
      %v694 = vsel %vm692, %v689, %v690
      %v695 = vsel %vm692, %v688, %v689
      %v696 = vsel %vm692, %v687, %v688
      %v697 = vsel %vm692, %v686, %v687
      %v698 = vsel %vm692, %v685, %v686
      %v699 = vsel %vm692, %v684, %v685
      %v700 = vsel %vm692, %v683, %v684
      %v701 = vsel %vm692, %v682, %v683
      %v702 = vsel %vm692, %v681, %v682
      %v703 = vsel %vm692, %v680, %v681
      %v704 = vsel %vm692, %v679, %v680
      %v705 = vsel %vm692, %v678, %v679
      %v706 = vsel %vm692, %v677, %v678
      %v707 = vsel %vm692, %v676, %v677
      %v708 = vsel %vm692, %v691, %v676
      %v709 = vsel %vm660, 1, 0
      %v710 = vsel %vm661, 1, 0
      %v711 = vsel %vm662, 1, 0
      %v712 = vsel %vm663, 1, 0
      %v713 = vsel %vm664, 1, 0
      %v714 = vsel %vm665, 1, 0
      %v715 = vsel %vm666, 1, 0
      %v716 = vsel %vm667, 1, 0
      %v717 = vsel %vm668, 1, 0
      %v718 = vsel %vm669, 1, 0
      %v719 = vsel %vm670, 1, 0
      %v720 = vsel %vm671, 1, 0
      %v721 = vsel %vm672, 1, 0
      %v722 = vsel %vm673, 1, 0
      %v723 = vsel %vm674, 1, 0
      %v724 = vsel %vm675, 1, 0
      %vm725 = vcmp.eq.s32.totalorder %v709, 1
      %vm726 = vcmp.eq.s32.totalorder %v710, 1
      %vm727 = vcmp.eq.s32.totalorder %v711, 1
      %vm728 = vcmp.eq.s32.totalorder %v712, 1
      %vm729 = vcmp.eq.s32.totalorder %v713, 1
      %vm730 = vcmp.eq.s32.totalorder %v714, 1
      %vm731 = vcmp.eq.s32.totalorder %v715, 1
      %vm732 = vcmp.eq.s32.totalorder %v716, 1
      %vm733 = vcmp.eq.s32.totalorder %v717, 1
      %vm734 = vcmp.eq.s32.totalorder %v718, 1
      %vm735 = vcmp.eq.s32.totalorder %v719, 1
      %vm736 = vcmp.eq.s32.totalorder %v720, 1
      %vm737 = vcmp.eq.s32.totalorder %v721, 1
      %vm738 = vcmp.eq.s32.totalorder %v722, 1
      %vm739 = vcmp.eq.s32.totalorder %v723, 1
      %vm740 = vcmp.eq.s32.totalorder %v724, 1
      %v741 = vsel %vm725, 0.0, %v707
      %v742 = vsel %vm726, 0.0, %v706
      %v743 = vsel %vm727, 0.0, %v705
      %v744 = vsel %vm728, 0.0, %v704
      %v745 = vsel %vm729, 0.0, %v703
      %v746 = vsel %vm730, 0.0, %v702
      %v747 = vsel %vm731, 0.0, %v701
      %v748 = vsel %vm732, 0.0, %v700
      %v749 = vsel %vm733, 0.0, %v699
      %v750 = vsel %vm734, 0.0, %v698
      %v751 = vsel %vm735, 0.0, %v697
      %v752 = vsel %vm736, 0.0, %v696
      %v753 = vsel %vm737, 0.0, %v695
      %v754 = vsel %vm738, 0.0, %v694
      %v755 = vsel %vm739, 0.0, %v693
      %v756 = vsel %vm740, 0.0, %v708
      %v757 = vpack.c.bf16 %v645, %v644
      %v758 = vpack.c.bf16 %v647, %v646
      %v759 = vpack.c.bf16 %v649, %v648
      %v760 = vpack.c.bf16 %v651, %v650
      %v761 = vpack.c.bf16 %v653, %v652
      %v762 = vpack.c.bf16 %v655, %v654
      %v763 = vpack.c.bf16 %v657, %v656
      %v764 = vpack.c.bf16 %v659, %v658
      %v765 = vld [vmem:[%s2] sm:$0xf]
      %v766 = vld [vmem:[%s2 + $0x4] sm:$0xf]
      %v767 = vld [vmem:[%s2 + $0x8] sm:$0xf]
      %v768 = vld [vmem:[%s2 + $0xc] sm:$0xf]
      %v769 = vpack.c.bf16 %v548, %v547
      %v770 = vpack.c.bf16 %v550, %v549
      %v771 = vpack.c.bf16 %v552, %v551
      %v772 = vpack.c.bf16 %v554, %v553
      %v773 = vpack.c.bf16 %v556, %v555
      %v774 = vpack.c.bf16 %v558, %v557
      %v775 = vpack.c.bf16 %v560, %v559
      %v776 = vpack.c.bf16 %v562, %v561
      %v777 = vld [vmem:[%s3] sm:$0xf]
      %v778 = vld [vmem:[%s3 + $0x4] sm:$0xf]
      %v779 = vld [vmem:[%s3 + $0x8] sm:$0xf]
      %v780 = vld [vmem:[%s3 + $0xc] sm:$0xf]
      %v785 = vunpack.c.l.b16 %v777
      %v786 = vunpack.c.l.b16 %v778
      %v787 = vunpack.c.l.b16 %v779
      %v788 = vunpack.c.l.b16 %v780
      %v789 = vpack.c.b16 %v786, %v785
      %v790 = vpack.c.b16 %v788, %v787
      %vm793 = vcmask 261120
      %v795 = vsel %vm793, %v769, 0
      %v798 = vsel %vm793, %v770, 0
      %v801 = vsel %vm793, %v771, 0
      %v804 = vsel %vm793, %v772, 0
      %v807 = vsel %vm793, %v773, 0
      %v810 = vsel %vm793, %v774, 0
      %v813 = vsel %vm793, %v775, 0
      %v816 = vsel %vm793, %v776, 0
      %818 = vmatprep.subr.bf16.mxu0 0
      %819 = vmatpush1.bf16.msra.mxu0 0
      %820 = vmatprep.subr.bf16.mxu0 0
      %821 = vmatpush1.bf16.msra.mxu0 0
      %822 = vmatprep.subr.bf16.mxu0 0
      %823 = vmatpush1.bf16.msra.mxu0 0
      %824 = vmatprep.subr.bf16.mxu0 0
      %825 = vmatpush1.bf16.msra.mxu0 0
      %826 = vmatprep.subr.bf16.mxu0 0
      %827 = vmatpush1.bf16.msra.mxu0 0
      %828 = vmatprep.subr.bf16.mxu0 0
      %829 = vmatpush1.bf16.msra.mxu0 0
      %830 = vmatprep.subr.bf16.mxu0 0
      %831 = vmatpush1.bf16.msra.mxu0 %v790
      %832 = vmatprep.subr.bf16.mxu0 0
      %833 = vmatpush1.bf16.msra.mxu0 %v789
      %834 = vmatprep.subr.bf16.mxu0 0
      %835 = vmatpush2.bf16.msra.mxu0 0
      %836 = vmatprep.subr.bf16.mxu0 0
      %837 = vmatpush2.bf16.msra.mxu0 0
      %838 = vmatprep.subr.bf16.mxu0 0
      %839 = vmatpush2.bf16.msra.mxu0 0
      %840 = vmatprep.subr.bf16.mxu0 0
      %841 = vmatpush2.bf16.msra.mxu0 0
      %842 = vmatprep.subr.bf16.mxu0 0
      %843 = vmatpush2.bf16.msra.mxu0 0
      %844 = vmatprep.subr.bf16.mxu0 0
      %845 = vmatpush2.bf16.msra.mxu0 0
      %846 = vmatprep.subr.bf16.mxu0 0
      %847 = vmatpush2.bf16.msra.mxu0 0
      %848 = vmatprep.subr.bf16.mxu0 0
      %849 = vmatpush2.bf16.msra.mxu0 0
      %850 = vmatprep.mubr.bf16.mxu0 0
      %851 = vmatmul.mubr.bf16.gmra.mxu0 %v795
      %v852 = vpop.f32.mrf.mxu0
      %v853 = vadd.f32 0.0, %v852
      %v854 = vpop.f32.mrf.mxu0
      %v855 = vpop.f32.mrf.mxu0
      %v856 = vadd.f32 0.0, %v855
      %v857 = vpop.f32.mrf.mxu0
      %858 = vmatprep.mubr.bf16.mxu0 0
      %859 = vmatmul.mubr.bf16.gmra.mxu0 %v798
      %v860 = vpop.f32.mrf.mxu0
      %v861 = vadd.f32 0.0, %v860
      %v862 = vpop.f32.mrf.mxu0
      %v863 = vpop.f32.mrf.mxu0
      %v864 = vadd.f32 0.0, %v863
      %v865 = vpop.f32.mrf.mxu0
      %866 = vmatprep.mubr.bf16.mxu0 0
      %867 = vmatmul.mubr.bf16.gmra.mxu0 %v801
      %v868 = vpop.f32.mrf.mxu0
      %v869 = vadd.f32 0.0, %v868
      %v870 = vpop.f32.mrf.mxu0
      %v871 = vpop.f32.mrf.mxu0
      %v872 = vadd.f32 0.0, %v871
      %v873 = vpop.f32.mrf.mxu0
      %874 = vmatprep.mubr.bf16.mxu0 0
      %875 = vmatmul.mubr.bf16.gmra.mxu0 %v804
      %v876 = vpop.f32.mrf.mxu0
      %v877 = vadd.f32 0.0, %v876
      %v878 = vpop.f32.mrf.mxu0
      %v879 = vpop.f32.mrf.mxu0
      %v880 = vadd.f32 0.0, %v879
      %v881 = vpop.f32.mrf.mxu0
      %882 = vmatprep.mubr.bf16.mxu0 0
      %883 = vmatmul.mubr.bf16.gmra.mxu0 %v807
      %v884 = vpop.f32.mrf.mxu0
      %v885 = vadd.f32 0.0, %v884
      %v886 = vpop.f32.mrf.mxu0
      %v887 = vpop.f32.mrf.mxu0
      %v888 = vadd.f32 0.0, %v887
      %v889 = vpop.f32.mrf.mxu0
      %890 = vmatprep.mubr.bf16.mxu0 0
      %891 = vmatmul.mubr.bf16.gmra.mxu0 %v810
      %v892 = vpop.f32.mrf.mxu0
      %v893 = vadd.f32 0.0, %v892
      %v894 = vpop.f32.mrf.mxu0
      %v895 = vpop.f32.mrf.mxu0
      %v896 = vadd.f32 0.0, %v895
      %v897 = vpop.f32.mrf.mxu0
      %898 = vmatprep.mubr.bf16.mxu0 0
      %899 = vmatmul.mubr.bf16.gmra.mxu0 %v813
      %v900 = vpop.f32.mrf.mxu0
      %v901 = vadd.f32 0.0, %v900
      %v902 = vpop.f32.mrf.mxu0
      %v903 = vpop.f32.mrf.mxu0
      %v904 = vadd.f32 0.0, %v903
      %v905 = vpop.f32.mrf.mxu0
      %906 = vmatprep.mubr.bf16.mxu0 0
      %907 = vmatmul.mubr.bf16.gmra.mxu0 %v816
      %v908 = vpop.f32.mrf.mxu0
      %v909 = vadd.f32 0.0, %v908
      %v910 = vpop.f32.mrf.mxu0
      %v911 = vpop.f32.mrf.mxu0
      %v912 = vadd.f32 0.0, %v911
      %v913 = vpop.f32.mrf.mxu0
      %914 = vdwg.mxu0
      %v919 = vunpack.c.l.b16 %v765
      %v920 = vunpack.c.l.b16 %v766
      %v921 = vunpack.c.l.b16 %v767
      %v922 = vunpack.c.l.b16 %v768
      %v923 = vpack.c.b16 %v920, %v919
      %v924 = vpack.c.b16 %v922, %v921
      %v928 = vsel %vm793, %v757, 0
      %v931 = vsel %vm793, %v758, 0
      %v934 = vsel %vm793, %v759, 0
      %v937 = vsel %vm793, %v760, 0
      %v940 = vsel %vm793, %v761, 0
      %v943 = vsel %vm793, %v762, 0
      %v946 = vsel %vm793, %v763, 0
      %v949 = vsel %vm793, %v764, 0
      %951 = vmatprep.subr.bf16.mxu0 0
      %952 = vmatpush1.bf16.msra.mxu0 0
      %953 = vmatprep.subr.bf16.mxu0 0
      %954 = vmatpush1.bf16.msra.mxu0 0
      %955 = vmatprep.subr.bf16.mxu0 0
      %956 = vmatpush1.bf16.msra.mxu0 0
      %957 = vmatprep.subr.bf16.mxu0 0
      %958 = vmatpush1.bf16.msra.mxu0 0
      %959 = vmatprep.subr.bf16.mxu0 0
      %960 = vmatpush1.bf16.msra.mxu0 0
      %961 = vmatprep.subr.bf16.mxu0 0
      %962 = vmatpush1.bf16.msra.mxu0 0
      %963 = vmatprep.subr.bf16.mxu0 0
      %964 = vmatpush1.bf16.msra.mxu0 %v924
      %965 = vmatprep.subr.bf16.mxu0 0
      %966 = vmatpush1.bf16.msra.mxu0 %v923
      %967 = vmatprep.subr.bf16.mxu0 0
      %968 = vmatpush2.bf16.msra.mxu0 0
      %969 = vmatprep.subr.bf16.mxu0 0
      %970 = vmatpush2.bf16.msra.mxu0 0
      %971 = vmatprep.subr.bf16.mxu0 0
      %972 = vmatpush2.bf16.msra.mxu0 0
      %973 = vmatprep.subr.bf16.mxu0 0
      %974 = vmatpush2.bf16.msra.mxu0 0
      %975 = vmatprep.subr.bf16.mxu0 0
      %976 = vmatpush2.bf16.msra.mxu0 0
      %977 = vmatprep.subr.bf16.mxu0 0
      %978 = vmatpush2.bf16.msra.mxu0 0
      %979 = vmatprep.subr.bf16.mxu0 0
      %980 = vmatpush2.bf16.msra.mxu0 0
      %981 = vmatprep.subr.bf16.mxu0 0
      %982 = vmatpush2.bf16.msra.mxu0 0
      %983 = vmatprep.mubr.bf16.mxu0 0
      %984 = vmatmul.mubr.bf16.gmra.mxu0 %v928
      %v985 = vpop.f32.mrf.mxu0
      %v986 = vadd.f32 %v853, %v985
      %v987 = vpop.f32.mrf.mxu0
      %v988 = vpop.f32.mrf.mxu0
      %v989 = vadd.f32 %v856, %v988
      %v990 = vpop.f32.mrf.mxu0
      %991 = vmatprep.mubr.bf16.mxu0 0
      %992 = vmatmul.mubr.bf16.gmra.mxu0 %v931
      %v993 = vpop.f32.mrf.mxu0
      %v994 = vadd.f32 %v861, %v993
      %v995 = vpop.f32.mrf.mxu0
      %v996 = vpop.f32.mrf.mxu0
      %v997 = vadd.f32 %v864, %v996
      %v998 = vpop.f32.mrf.mxu0
      %999 = vmatprep.mubr.bf16.mxu0 0
      %1000 = vmatmul.mubr.bf16.gmra.mxu0 %v934
      %v1001 = vpop.f32.mrf.mxu0
      %v1002 = vadd.f32 %v869, %v1001
      %v1003 = vpop.f32.mrf.mxu0
      %v1004 = vpop.f32.mrf.mxu0
      %v1005 = vadd.f32 %v872, %v1004
      %v1006 = vpop.f32.mrf.mxu0
      %1007 = vmatprep.mubr.bf16.mxu0 0
      %1008 = vmatmul.mubr.bf16.gmra.mxu0 %v937
      %v1009 = vpop.f32.mrf.mxu0
      %v1010 = vadd.f32 %v877, %v1009
      %v1011 = vpop.f32.mrf.mxu0
      %v1012 = vpop.f32.mrf.mxu0
      %v1013 = vadd.f32 %v880, %v1012
      %v1014 = vpop.f32.mrf.mxu0
      %1015 = vmatprep.mubr.bf16.mxu0 0
      %1016 = vmatmul.mubr.bf16.gmra.mxu0 %v940
      %v1017 = vpop.f32.mrf.mxu0
      %v1018 = vadd.f32 %v885, %v1017
      %v1019 = vpop.f32.mrf.mxu0
      %v1020 = vpop.f32.mrf.mxu0
      %v1021 = vadd.f32 %v888, %v1020
      %v1022 = vpop.f32.mrf.mxu0
      %1023 = vmatprep.mubr.bf16.mxu0 0
      %1024 = vmatmul.mubr.bf16.gmra.mxu0 %v943
      %v1025 = vpop.f32.mrf.mxu0
      %v1026 = vadd.f32 %v893, %v1025
      %v1027 = vpop.f32.mrf.mxu0
      %v1028 = vpop.f32.mrf.mxu0
      %v1029 = vadd.f32 %v896, %v1028
      %v1030 = vpop.f32.mrf.mxu0
      %1031 = vmatprep.mubr.bf16.mxu0 0
      %1032 = vmatmul.mubr.bf16.gmra.mxu0 %v946
      %v1033 = vpop.f32.mrf.mxu0
      %v1034 = vadd.f32 %v901, %v1033
      %v1035 = vpop.f32.mrf.mxu0
      %v1036 = vpop.f32.mrf.mxu0
      %v1037 = vadd.f32 %v904, %v1036
      %v1038 = vpop.f32.mrf.mxu0
      %1039 = vmatprep.mubr.bf16.mxu0 0
      %1040 = vmatmul.mubr.bf16.gmra.mxu0 %v949
      %v1041 = vpop.f32.mrf.mxu0
      %v1042 = vadd.f32 %v909, %v1041
      %v1043 = vpop.f32.mrf.mxu0
      %v1044 = vpop.f32.mrf.mxu0
      %v1045 = vadd.f32 %v912, %v1044
      %v1046 = vpop.f32.mrf.mxu0
      %1047 = vdwg.mxu0
      %v1048 = vpack.c.bf16 %v742, %v741
      %v1049 = vpack.c.bf16 %v744, %v743
      %v1050 = vpack.c.bf16 %v746, %v745
      %v1051 = vpack.c.bf16 %v748, %v747
      %v1052 = vpack.c.bf16 %v750, %v749
      %v1053 = vpack.c.bf16 %v752, %v751
      %v1054 = vpack.c.bf16 %v754, %v753
      %v1055 = vpack.c.bf16 %v756, %v755
      %v1056 = vld [vmem:[%s4] sm:$0xf]
      %v1057 = vld [vmem:[%s4 + $0x4] sm:$0xf]
      %v1058 = vld [vmem:[%s4 + $0x8] sm:$0xf]
      %v1059 = vld [vmem:[%s4 + $0xc] sm:$0xf]
      %v1064 = vunpack.c.l.b16 %v1056
      %v1065 = vunpack.c.l.b16 %v1057
      %v1066 = vunpack.c.l.b16 %v1058
      %v1067 = vunpack.c.l.b16 %v1059
      %v1068 = vpack.c.b16 %v1065, %v1064
      %v1069 = vpack.c.b16 %v1067, %v1066
      %v1073 = vsel %vm793, %v1048, 0
      %v1076 = vsel %vm793, %v1049, 0
      %v1079 = vsel %vm793, %v1050, 0
      %v1082 = vsel %vm793, %v1051, 0
      %v1085 = vsel %vm793, %v1052, 0
      %v1088 = vsel %vm793, %v1053, 0
      %v1091 = vsel %vm793, %v1054, 0
      %v1094 = vsel %vm793, %v1055, 0
      %1096 = vmatprep.subr.bf16.mxu0 0
      %1097 = vmatpush1.bf16.msra.mxu0 0
      %1098 = vmatprep.subr.bf16.mxu0 0
      %1099 = vmatpush1.bf16.msra.mxu0 0
      %1100 = vmatprep.subr.bf16.mxu0 0
      %1101 = vmatpush1.bf16.msra.mxu0 0
      %1102 = vmatprep.subr.bf16.mxu0 0
      %1103 = vmatpush1.bf16.msra.mxu0 0
      %1104 = vmatprep.subr.bf16.mxu0 0
      %1105 = vmatpush1.bf16.msra.mxu0 0
      %1106 = vmatprep.subr.bf16.mxu0 0
      %1107 = vmatpush1.bf16.msra.mxu0 0
      %1108 = vmatprep.subr.bf16.mxu0 0
      %1109 = vmatpush1.bf16.msra.mxu0 %v1069
      %1110 = vmatprep.subr.bf16.mxu0 0
      %1111 = vmatpush1.bf16.msra.mxu0 %v1068
      %1112 = vmatprep.subr.bf16.mxu0 0
      %1113 = vmatpush2.bf16.msra.mxu0 0
      %1114 = vmatprep.subr.bf16.mxu0 0
      %1115 = vmatpush2.bf16.msra.mxu0 0
      %1116 = vmatprep.subr.bf16.mxu0 0
      %1117 = vmatpush2.bf16.msra.mxu0 0
      %1118 = vmatprep.subr.bf16.mxu0 0
      %1119 = vmatpush2.bf16.msra.mxu0 0
      %1120 = vmatprep.subr.bf16.mxu0 0
      %1121 = vmatpush2.bf16.msra.mxu0 0
      %1122 = vmatprep.subr.bf16.mxu0 0
      %1123 = vmatpush2.bf16.msra.mxu0 0
      %1124 = vmatprep.subr.bf16.mxu0 0
      %1125 = vmatpush2.bf16.msra.mxu0 0
      %1126 = vmatprep.subr.bf16.mxu0 0
      %1127 = vmatpush2.bf16.msra.mxu0 0
      %1128 = vmatprep.mubr.bf16.mxu0 0
      %1129 = vmatmul.mubr.bf16.gmra.mxu0 %v1073
      %v1130 = vpop.f32.mrf.mxu0
      %v1131 = vadd.f32 0.0, %v1130
      %v1132 = vpop.f32.mrf.mxu0
      %v1133 = vpop.f32.mrf.mxu0
      %v1134 = vadd.f32 0.0, %v1133
      %v1135 = vpop.f32.mrf.mxu0
      %1136 = vmatprep.mubr.bf16.mxu0 0
      %1137 = vmatmul.mubr.bf16.gmra.mxu0 %v1076
      %v1138 = vpop.f32.mrf.mxu0
      %v1139 = vadd.f32 0.0, %v1138
      %v1140 = vpop.f32.mrf.mxu0
      %v1141 = vpop.f32.mrf.mxu0
      %v1142 = vadd.f32 0.0, %v1141
      %v1143 = vpop.f32.mrf.mxu0
      %1144 = vmatprep.mubr.bf16.mxu0 0
      %1145 = vmatmul.mubr.bf16.gmra.mxu0 %v1079
      %v1146 = vpop.f32.mrf.mxu0
      %v1147 = vadd.f32 0.0, %v1146
      %v1148 = vpop.f32.mrf.mxu0
      %v1149 = vpop.f32.mrf.mxu0
      %v1150 = vadd.f32 0.0, %v1149
      %v1151 = vpop.f32.mrf.mxu0
      %1152 = vmatprep.mubr.bf16.mxu0 0
      %1153 = vmatmul.mubr.bf16.gmra.mxu0 %v1082
      %v1154 = vpop.f32.mrf.mxu0
      %v1155 = vadd.f32 0.0, %v1154
      %v1156 = vpop.f32.mrf.mxu0
      %v1157 = vpop.f32.mrf.mxu0
      %v1158 = vadd.f32 0.0, %v1157
      %v1159 = vpop.f32.mrf.mxu0
      %1160 = vmatprep.mubr.bf16.mxu0 0
      %1161 = vmatmul.mubr.bf16.gmra.mxu0 %v1085
      %v1162 = vpop.f32.mrf.mxu0
      %v1163 = vadd.f32 0.0, %v1162
      %v1164 = vpop.f32.mrf.mxu0
      %v1165 = vpop.f32.mrf.mxu0
      %v1166 = vadd.f32 0.0, %v1165
      %v1167 = vpop.f32.mrf.mxu0
      %1168 = vmatprep.mubr.bf16.mxu0 0
      %1169 = vmatmul.mubr.bf16.gmra.mxu0 %v1088
      %v1170 = vpop.f32.mrf.mxu0
      %v1171 = vadd.f32 0.0, %v1170
      %v1172 = vpop.f32.mrf.mxu0
      %v1173 = vpop.f32.mrf.mxu0
      %v1174 = vadd.f32 0.0, %v1173
      %v1175 = vpop.f32.mrf.mxu0
      %1176 = vmatprep.mubr.bf16.mxu0 0
      %1177 = vmatmul.mubr.bf16.gmra.mxu0 %v1091
      %v1178 = vpop.f32.mrf.mxu0
      %v1179 = vadd.f32 0.0, %v1178
      %v1180 = vpop.f32.mrf.mxu0
      %v1181 = vpop.f32.mrf.mxu0
      %v1182 = vadd.f32 0.0, %v1181
      %v1183 = vpop.f32.mrf.mxu0
      %1184 = vmatprep.mubr.bf16.mxu0 0
      %1185 = vmatmul.mubr.bf16.gmra.mxu0 %v1094
      %v1186 = vpop.f32.mrf.mxu0
      %v1187 = vadd.f32 0.0, %v1186
      %v1188 = vpop.f32.mrf.mxu0
      %v1189 = vpop.f32.mrf.mxu0
      %v1190 = vadd.f32 0.0, %v1189
      %v1191 = vpop.f32.mrf.mxu0
      %1192 = vdwg.mxu0
      %v1193 = vadd.f32 %v986, %v1131
      %v1194 = vadd.f32 %v989, %v1134
      %v1195 = vadd.f32 %v994, %v1139
      %v1196 = vadd.f32 %v997, %v1142
      %v1197 = vadd.f32 %v1002, %v1147
      %v1198 = vadd.f32 %v1005, %v1150
      %v1199 = vadd.f32 %v1010, %v1155
      %v1200 = vadd.f32 %v1013, %v1158
      %v1201 = vadd.f32 %v1018, %v1163
      %v1202 = vadd.f32 %v1021, %v1166
      %v1203 = vadd.f32 %v1026, %v1171
      %v1204 = vadd.f32 %v1029, %v1174
      %v1205 = vadd.f32 %v1034, %v1179
      %v1206 = vadd.f32 %v1037, %v1182
      %v1207 = vadd.f32 %v1042, %v1187
      %v1208 = vadd.f32 %v1045, %v1190
      %v1209 = vld [vmem:[%s5] sm:$0x1]
      %v1211 = vlaneseq
      %v1212 = vshrl.u32 %v1211, 7
      %v1213 = vsub.s32 0, %v1212
      %v1214 = vrot.slane %v1209, %v1213
      %v1216 = vadd.f32 %v1193, %v1214
      %v1217 = vadd.f32 %v1194, %v1214
      %v1218 = vadd.f32 %v1195, %v1214
      %v1219 = vadd.f32 %v1196, %v1214
      %v1220 = vadd.f32 %v1197, %v1214
      %v1221 = vadd.f32 %v1198, %v1214
      %v1222 = vadd.f32 %v1199, %v1214
      %v1223 = vadd.f32 %v1200, %v1214
      %v1224 = vadd.f32 %v1201, %v1214
      %v1225 = vadd.f32 %v1202, %v1214
      %v1226 = vadd.f32 %v1203, %v1214
      %v1227 = vadd.f32 %v1204, %v1214
      %v1228 = vadd.f32 %v1205, %v1214
      %v1229 = vadd.f32 %v1206, %v1214
      %v1230 = vadd.f32 %v1207, %v1214
      %v1231 = vadd.f32 %v1208, %v1214
      %v1232 = vpack.c.bf16 %v1217, %v1216
      %v1233 = vpack.c.bf16 %v1219, %v1218
      %v1234 = vpack.c.bf16 %v1221, %v1220
      %v1235 = vpack.c.bf16 %v1223, %v1222
      %v1236 = vpack.c.bf16 %v1225, %v1224
      %v1237 = vpack.c.bf16 %v1227, %v1226
      %v1238 = vpack.c.bf16 %v1229, %v1228
      %v1239 = vpack.c.bf16 %v1231, %v1230
      %1248 = vrot.lane.b32.xlu0 %v1232, 96
      %v1249 = vpop.permute.xlu0 %1248
      %1250 = vrot.lane.b32.xlu0 %v1233, 96
      %v1251 = vpop.permute.xlu0 %1250
      %1252 = vrot.lane.b32.xlu0 %v1234, 96
      %v1253 = vpop.permute.xlu0 %1252
      %1254 = vrot.lane.b32.xlu0 %v1235, 96
      %v1255 = vpop.permute.xlu0 %1254
      %1256 = vrot.lane.b32.xlu0 %v1236, 96
      %v1257 = vpop.permute.xlu0 %1256
      %1258 = vrot.lane.b32.xlu0 %v1237, 96
      %v1259 = vpop.permute.xlu0 %1258
      %1260 = vrot.lane.b32.xlu0 %v1238, 96
      %v1261 = vpop.permute.xlu0 %1260
      %1262 = vrot.lane.b32.xlu0 %v1239, 96
      %v1263 = vpop.permute.xlu0 %1262
      %v1265 = vsel %vm793, %v1232, 0
      %v1268 = vsel %vm793, %v1233, 0
      %v1271 = vsel %vm793, %v1234, 0
      %v1274 = vsel %vm793, %v1235, 0
      %v1277 = vsel %vm793, %v1236, 0
      %v1280 = vsel %vm793, %v1237, 0
      %v1283 = vsel %vm793, %v1238, 0
      %v1286 = vsel %vm793, %v1239, 0
      %v1289 = vsel %vm793, %v1249, 0
      %v1292 = vsel %vm793, %v1251, 0
      %v1295 = vsel %vm793, %v1253, 0
      %v1298 = vsel %vm793, %v1255, 0
      %v1301 = vsel %vm793, %v1257, 0
      %v1304 = vsel %vm793, %v1259, 0
      %v1307 = vsel %vm793, %v1261, 0
      %v1310 = vsel %vm793, %v1263, 0
      %1312 = vmatprep.subr.bf16.mxu0 0
      %1313 = vmatpush1.bf16.xpose.msra.mxu0 %v1310
      %1314 = vmatprep.subr.bf16.mxu0 0
      %1315 = vmatpush1.bf16.xpose.msra.mxu0 %v1307
      %1316 = vmatprep.subr.bf16.mxu0 0
      %1317 = vmatpush1.bf16.xpose.msra.mxu0 %v1304
      %1318 = vmatprep.subr.bf16.mxu0 0
      %1319 = vmatpush1.bf16.xpose.msra.mxu0 %v1301
      %1320 = vmatprep.subr.bf16.mxu0 0
      %1321 = vmatpush1.bf16.xpose.msra.mxu0 %v1298
      %1322 = vmatprep.subr.bf16.mxu0 0
      %1323 = vmatpush1.bf16.xpose.msra.mxu0 %v1295
      %1324 = vmatprep.subr.bf16.mxu0 0
      %1325 = vmatpush1.bf16.xpose.msra.mxu0 %v1292
      %1326 = vmatprep.subr.bf16.mxu0 0
      %1327 = vmatpush1.bf16.xpose.msra.mxu0 %v1289
      %1328 = vmatprep.subr.bf16.mxu0 0
      %1329 = vmatpush2.bf16.xpose.msra.mxu0 0
      %1330 = vmatprep.subr.bf16.mxu0 0
      %1331 = vmatpush2.bf16.xpose.msra.mxu0 0
      %1332 = vmatprep.subr.bf16.mxu0 0
      %1333 = vmatpush2.bf16.xpose.msra.mxu0 0
      %1334 = vmatprep.subr.bf16.mxu0 0
      %1335 = vmatpush2.bf16.xpose.msra.mxu0 0
      %1336 = vmatprep.subr.bf16.mxu0 0
      %1337 = vmatpush2.bf16.xpose.msra.mxu0 0
      %1338 = vmatprep.subr.bf16.mxu0 0
      %1339 = vmatpush2.bf16.xpose.msra.mxu0 0
      %1340 = vmatprep.subr.bf16.mxu0 0
      %1341 = vmatpush2.bf16.xpose.msra.mxu0 0
      %1342 = vmatprep.subr.bf16.mxu0 0
      %1343 = vmatpush2.bf16.xpose.msra.mxu0 0
      %1344 = vmatprep.mubr.bf16.mxu0 0
      %1345 = vmatmul.mubr.bf16.gmra.mxu0 %v1265
      %v1346 = vpop.f32.mrf.mxu0
      %v1347 = vadd.f32 0.0, %v1346
      %v1348 = vpop.f32.mrf.mxu0
      %v1349 = vpop.f32.mrf.mxu0
      %v1350 = vadd.f32 0.0, %v1349
      %v1351 = vpop.f32.mrf.mxu0
      %1352 = vmatprep.mubr.bf16.mxu0 0
      %1353 = vmatmul.mubr.bf16.gmra.mxu0 %v1268
      %v1354 = vpop.f32.mrf.mxu0
      %v1355 = vadd.f32 0.0, %v1354
      %v1356 = vpop.f32.mrf.mxu0
      %v1357 = vpop.f32.mrf.mxu0
      %v1358 = vadd.f32 0.0, %v1357
      %v1359 = vpop.f32.mrf.mxu0
      %1360 = vmatprep.mubr.bf16.mxu0 0
      %1361 = vmatmul.mubr.bf16.gmra.mxu0 %v1271
      %v1362 = vpop.f32.mrf.mxu0
      %v1363 = vadd.f32 0.0, %v1362
      %v1364 = vpop.f32.mrf.mxu0
      %v1365 = vpop.f32.mrf.mxu0
      %v1366 = vadd.f32 0.0, %v1365
      %v1367 = vpop.f32.mrf.mxu0
      %1368 = vmatprep.mubr.bf16.mxu0 0
      %1369 = vmatmul.mubr.bf16.gmra.mxu0 %v1274
      %v1370 = vpop.f32.mrf.mxu0
      %v1371 = vadd.f32 0.0, %v1370
      %v1372 = vpop.f32.mrf.mxu0
      %v1373 = vpop.f32.mrf.mxu0
      %v1374 = vadd.f32 0.0, %v1373
      %v1375 = vpop.f32.mrf.mxu0
      %1376 = vmatprep.mubr.bf16.mxu0 0
      %1377 = vmatmul.mubr.bf16.gmra.mxu0 %v1277
      %v1378 = vpop.f32.mrf.mxu0
      %v1379 = vadd.f32 0.0, %v1378
      %v1380 = vpop.f32.mrf.mxu0
      %v1381 = vpop.f32.mrf.mxu0
      %v1382 = vadd.f32 0.0, %v1381
      %v1383 = vpop.f32.mrf.mxu0
      %1384 = vmatprep.mubr.bf16.mxu0 0
      %1385 = vmatmul.mubr.bf16.gmra.mxu0 %v1280
      %v1386 = vpop.f32.mrf.mxu0
      %v1387 = vadd.f32 0.0, %v1386
      %v1388 = vpop.f32.mrf.mxu0
      %v1389 = vpop.f32.mrf.mxu0
      %v1390 = vadd.f32 0.0, %v1389
      %v1391 = vpop.f32.mrf.mxu0
      %1392 = vmatprep.mubr.bf16.mxu0 0
      %1393 = vmatmul.mubr.bf16.gmra.mxu0 %v1283
      %v1394 = vpop.f32.mrf.mxu0
      %v1395 = vadd.f32 0.0, %v1394
      %v1396 = vpop.f32.mrf.mxu0
      %v1397 = vpop.f32.mrf.mxu0
      %v1398 = vadd.f32 0.0, %v1397
      %v1399 = vpop.f32.mrf.mxu0
      %1400 = vmatprep.mubr.bf16.mxu0 0
      %1401 = vmatmul.mubr.bf16.gmra.mxu0 %v1286
      %v1402 = vpop.f32.mrf.mxu0
      %v1403 = vadd.f32 0.0, %v1402
      %v1404 = vpop.f32.mrf.mxu0
      %v1405 = vpop.f32.mrf.mxu0
      %v1406 = vadd.f32 0.0, %v1405
      %v1407 = vpop.f32.mrf.mxu0
      %1408 = vdwg.mxu0
      %1410 = vset.pattern.permute.xlu0 0
      %1411 = vperm.xlu0 %1410, %v451
      %v1412 = vpop.permute.xlu0 %1411
      %1415 = vset.pattern.permute.xlu0 0
      %1416 = vperm.xlu0 %1415, %v452
      %v1417 = vpop.permute.xlu0 %1416
      %1420 = vset.pattern.permute.xlu0 0
      %1421 = vperm.xlu0 %1420, %v453
      %v1422 = vpop.permute.xlu0 %1421
      %1425 = vset.pattern.permute.xlu0 0
      %1426 = vperm.xlu0 %1425, %v454
      %v1427 = vpop.permute.xlu0 %1426
      %1430 = vset.pattern.permute.xlu0 0
      %1431 = vperm.xlu0 %1430, %v455
      %v1432 = vpop.permute.xlu0 %1431
      %1435 = vset.pattern.permute.xlu0 0
      %1436 = vperm.xlu0 %1435, %v456
      %v1437 = vpop.permute.xlu0 %1436
      %1440 = vset.pattern.permute.xlu0 0
      %1441 = vperm.xlu0 %1440, %v457
      %v1442 = vpop.permute.xlu0 %1441
      %1445 = vset.pattern.permute.xlu0 0
      %1446 = vperm.xlu0 %1445, %v458
      %v1447 = vpop.permute.xlu0 %1446
      %1450 = vset.pattern.permute.xlu0 0
      %1451 = vperm.xlu0 %1450, %v459
      %v1452 = vpop.permute.xlu0 %1451
      %1455 = vset.pattern.permute.xlu0 0
      %1456 = vperm.xlu0 %1455, %v460
      %v1457 = vpop.permute.xlu0 %1456
      %1460 = vset.pattern.permute.xlu0 0
      %1461 = vperm.xlu0 %1460, %v461
      %v1462 = vpop.permute.xlu0 %1461
      %1465 = vset.pattern.permute.xlu0 0
      %1466 = vperm.xlu0 %1465, %v462
      %v1467 = vpop.permute.xlu0 %1466
      %1470 = vset.pattern.permute.xlu0 0
      %1471 = vperm.xlu0 %1470, %v463
      %v1472 = vpop.permute.xlu0 %1471
      %1475 = vset.pattern.permute.xlu0 0
      %1476 = vperm.xlu0 %1475, %v464
      %v1477 = vpop.permute.xlu0 %1476
      %1480 = vset.pattern.permute.xlu0 0
      %1481 = vperm.xlu0 %1480, %v465
      %v1482 = vpop.permute.xlu0 %1481
      %1485 = vset.pattern.permute.xlu0 0
      %1486 = vperm.xlu0 %1485, %v466
      %v1487 = vpop.permute.xlu0 %1486
      %v1489 = vmul.f32 %v1347, %v1412
      %v1490 = vmul.f32 %v1350, %v1417
      %v1491 = vmul.f32 %v1355, %v1422
      %v1492 = vmul.f32 %v1358, %v1427
      %v1493 = vmul.f32 %v1363, %v1432
      %v1494 = vmul.f32 %v1366, %v1437
      %v1495 = vmul.f32 %v1371, %v1442
      %v1496 = vmul.f32 %v1374, %v1447
      %v1497 = vmul.f32 %v1379, %v1452
      %v1498 = vmul.f32 %v1382, %v1457
      %v1499 = vmul.f32 %v1387, %v1462
      %v1500 = vmul.f32 %v1390, %v1467
      %v1501 = vmul.f32 %v1395, %v1472
      %v1502 = vmul.f32 %v1398, %v1477
      %v1503 = vmul.f32 %v1403, %v1482
      %v1504 = vmul.f32 %v1406, %v1487
      %v1505 = vlaneseq
      %v1506 = vand.u32 %v1505, 127
      %vm1507 = vcmp.ge.s32.totalorder %v1506, %v371
      %vm1508 = vcmp.ge.s32.totalorder %v1506, %v372
      %vm1509 = vcmp.ge.s32.totalorder %v1506, %v373
      %vm1510 = vcmp.ge.s32.totalorder %v1506, %v374
      %vm1511 = vcmp.ge.s32.totalorder %v1506, %v375
      %vm1512 = vcmp.ge.s32.totalorder %v1506, %v376
      %vm1513 = vcmp.ge.s32.totalorder %v1506, %v377
      %vm1514 = vcmp.ge.s32.totalorder %v1506, %v378
      %vm1515 = vcmp.ge.s32.totalorder %v1506, %v379
      %vm1516 = vcmp.ge.s32.totalorder %v1506, %v380
      %vm1517 = vcmp.ge.s32.totalorder %v1506, %v381
      %vm1518 = vcmp.ge.s32.totalorder %v1506, %v382
      %vm1519 = vcmp.ge.s32.totalorder %v1506, %v383
      %vm1520 = vcmp.ge.s32.totalorder %v1506, %v384
      %vm1521 = vcmp.ge.s32.totalorder %v1506, %v385
      %vm1522 = vcmp.ge.s32.totalorder %v1506, %v386
      %v1523 = vadd.s32 %v371, %v322
      %v1524 = vadd.s32 %v372, %v323
      %v1525 = vadd.s32 %v373, %v324
      %v1526 = vadd.s32 %v374, %v325
      %v1527 = vadd.s32 %v375, %v326
      %v1528 = vadd.s32 %v376, %v327
      %v1529 = vadd.s32 %v377, %v328
      %v1530 = vadd.s32 %v378, %v329
      %v1531 = vadd.s32 %v379, %v330
      %v1532 = vadd.s32 %v380, %v331
      %v1533 = vadd.s32 %v381, %v332
      %v1534 = vadd.s32 %v382, %v333
      %v1535 = vadd.s32 %v383, %v334
      %v1536 = vadd.s32 %v384, %v335
      %v1537 = vadd.s32 %v385, %v336
      %v1538 = vadd.s32 %v386, %v337
      %1539 = vset.pattern.permute.xlu0 0
      %1540 = vperm.xlu0 %1539, %v1523
      %v1541 = vpop.permute.xlu0 %1540
      %1542 = vset.pattern.permute.xlu0 0
      %1543 = vperm.xlu0 %1542, %v1524
      %v1544 = vpop.permute.xlu0 %1543
      %1545 = vset.pattern.permute.xlu0 0
      %1546 = vperm.xlu0 %1545, %v1525
      %v1547 = vpop.permute.xlu0 %1546
      %1548 = vset.pattern.permute.xlu0 0
      %1549 = vperm.xlu0 %1548, %v1526
      %v1550 = vpop.permute.xlu0 %1549
      %1551 = vset.pattern.permute.xlu0 0
      %1552 = vperm.xlu0 %1551, %v1527
      %v1553 = vpop.permute.xlu0 %1552
      %1554 = vset.pattern.permute.xlu0 0
      %1555 = vperm.xlu0 %1554, %v1528
      %v1556 = vpop.permute.xlu0 %1555
      %1557 = vset.pattern.permute.xlu0 0
      %1558 = vperm.xlu0 %1557, %v1529
      %v1559 = vpop.permute.xlu0 %1558
      %1560 = vset.pattern.permute.xlu0 0
      %1561 = vperm.xlu0 %1560, %v1530
      %v1562 = vpop.permute.xlu0 %1561
      %1563 = vset.pattern.permute.xlu0 0
      %1564 = vperm.xlu0 %1563, %v1531
      %v1565 = vpop.permute.xlu0 %1564
      %1566 = vset.pattern.permute.xlu0 0
      %1567 = vperm.xlu0 %1566, %v1532
      %v1568 = vpop.permute.xlu0 %1567
      %1569 = vset.pattern.permute.xlu0 0
      %1570 = vperm.xlu0 %1569, %v1533
      %v1571 = vpop.permute.xlu0 %1570
      %1572 = vset.pattern.permute.xlu0 0
      %1573 = vperm.xlu0 %1572, %v1534
      %v1574 = vpop.permute.xlu0 %1573
      %1575 = vset.pattern.permute.xlu0 0
      %1576 = vperm.xlu0 %1575, %v1535
      %v1577 = vpop.permute.xlu0 %1576
      %1578 = vset.pattern.permute.xlu0 0
      %1579 = vperm.xlu0 %1578, %v1536
      %v1580 = vpop.permute.xlu0 %1579
      %1581 = vset.pattern.permute.xlu0 0
      %1582 = vperm.xlu0 %1581, %v1537
      %v1583 = vpop.permute.xlu0 %1582
      %1584 = vset.pattern.permute.xlu0 0
      %1585 = vperm.xlu0 %1584, %v1538
      %v1586 = vpop.permute.xlu0 %1585
      %vm1587 = vcmp.lt.s32.totalorder %v1506, %v1541
      %vm1588 = vcmp.lt.s32.totalorder %v1506, %v1544
      %vm1589 = vcmp.lt.s32.totalorder %v1506, %v1547
      %vm1590 = vcmp.lt.s32.totalorder %v1506, %v1550
      %vm1591 = vcmp.lt.s32.totalorder %v1506, %v1553
      %vm1592 = vcmp.lt.s32.totalorder %v1506, %v1556
      %vm1593 = vcmp.lt.s32.totalorder %v1506, %v1559
      %vm1594 = vcmp.lt.s32.totalorder %v1506, %v1562
      %vm1595 = vcmp.lt.s32.totalorder %v1506, %v1565
      %vm1596 = vcmp.lt.s32.totalorder %v1506, %v1568
      %vm1597 = vcmp.lt.s32.totalorder %v1506, %v1571
      %vm1598 = vcmp.lt.s32.totalorder %v1506, %v1574
      %vm1599 = vcmp.lt.s32.totalorder %v1506, %v1577
      %vm1600 = vcmp.lt.s32.totalorder %v1506, %v1580
      %vm1601 = vcmp.lt.s32.totalorder %v1506, %v1583
      %vm1602 = vcmp.lt.s32.totalorder %v1506, %v1586
      %vm1603 = vmand %vm1507, %vm1587
      %vm1604 = vmand %vm1508, %vm1588
      %vm1605 = vmand %vm1509, %vm1589
      %vm1606 = vmand %vm1510, %vm1590
      %vm1607 = vmand %vm1511, %vm1591
      %vm1608 = vmand %vm1512, %vm1592
      %vm1609 = vmand %vm1513, %vm1593
      %vm1610 = vmand %vm1514, %vm1594
      %vm1611 = vmand %vm1515, %vm1595
      %vm1612 = vmand %vm1516, %vm1596
      %vm1613 = vmand %vm1517, %vm1597
      %vm1614 = vmand %vm1518, %vm1598
      %vm1615 = vmand %vm1519, %vm1599
      %vm1616 = vmand %vm1520, %vm1600
      %vm1617 = vmand %vm1521, %vm1601
      %vm1618 = vmand %vm1522, %vm1602
      %v1619 = vsel %vm1603, %v1489, -1e+30
      %v1620 = vsel %vm1604, %v1490, -1e+30
      %v1621 = vsel %vm1605, %v1491, -1e+30
      %v1622 = vsel %vm1606, %v1492, -1e+30
      %v1623 = vsel %vm1607, %v1493, -1e+30
      %v1624 = vsel %vm1608, %v1494, -1e+30
      %v1625 = vsel %vm1609, %v1495, -1e+30
      %v1626 = vsel %vm1610, %v1496, -1e+30
      %v1627 = vsel %vm1611, %v1497, -1e+30
      %v1628 = vsel %vm1612, %v1498, -1e+30
      %v1629 = vsel %vm1613, %v1499, -1e+30
      %v1630 = vsel %vm1614, %v1500, -1e+30
      %v1631 = vsel %vm1615, %v1501, -1e+30
      %v1632 = vsel %vm1616, %v1502, -1e+30
      %v1633 = vsel %vm1617, %v1503, -1e+30
      %v1634 = vsel %vm1618, %v1504, -1e+30
      %1635 = vmax.xlane.f32.xlu0 %v1619
      %v1636 = vpop.xlane.xlu0 %1635
      %1637 = vmax.xlane.f32.xlu0 %v1620
      %v1638 = vpop.xlane.xlu0 %1637
      %1639 = vmax.xlane.f32.xlu0 %v1621
      %v1640 = vpop.xlane.xlu0 %1639
      %1641 = vmax.xlane.f32.xlu0 %v1622
      %v1642 = vpop.xlane.xlu0 %1641
      %1643 = vmax.xlane.f32.xlu0 %v1623
      %v1644 = vpop.xlane.xlu0 %1643
      %1645 = vmax.xlane.f32.xlu0 %v1624
      %v1646 = vpop.xlane.xlu0 %1645
      %1647 = vmax.xlane.f32.xlu0 %v1625
      %v1648 = vpop.xlane.xlu0 %1647
      %1649 = vmax.xlane.f32.xlu0 %v1626
      %v1650 = vpop.xlane.xlu0 %1649
      %1651 = vmax.xlane.f32.xlu0 %v1627
      %v1652 = vpop.xlane.xlu0 %1651
      %1653 = vmax.xlane.f32.xlu0 %v1628
      %v1654 = vpop.xlane.xlu0 %1653
      %1655 = vmax.xlane.f32.xlu0 %v1629
      %v1656 = vpop.xlane.xlu0 %1655
      %1657 = vmax.xlane.f32.xlu0 %v1630
      %v1658 = vpop.xlane.xlu0 %1657
      %1659 = vmax.xlane.f32.xlu0 %v1631
      %v1660 = vpop.xlane.xlu0 %1659
      %1661 = vmax.xlane.f32.xlu0 %v1632
      %v1662 = vpop.xlane.xlu0 %1661
      %1663 = vmax.xlane.f32.xlu0 %v1633
      %v1664 = vpop.xlane.xlu0 %1663
      %1665 = vmax.xlane.f32.xlu0 %v1634
      %v1666 = vpop.xlane.xlu0 %1665
      %v1667 = vsub.f32 %v1619, %v1636
      %v1668 = vsub.f32 %v1620, %v1638
      %v1669 = vsub.f32 %v1621, %v1640
      %v1670 = vsub.f32 %v1622, %v1642
      %v1671 = vsub.f32 %v1623, %v1644
      %v1672 = vsub.f32 %v1624, %v1646
      %v1673 = vsub.f32 %v1625, %v1648
      %v1674 = vsub.f32 %v1626, %v1650
      %v1675 = vsub.f32 %v1627, %v1652
      %v1676 = vsub.f32 %v1628, %v1654
      %v1677 = vsub.f32 %v1629, %v1656
      %v1678 = vsub.f32 %v1630, %v1658
      %v1679 = vsub.f32 %v1631, %v1660
      %v1680 = vsub.f32 %v1632, %v1662
      %v1681 = vsub.f32 %v1633, %v1664
      %v1682 = vsub.f32 %v1634, %v1666
      %v1683 = vmul.f32 %v1667, 1.442695
      %v1684 = vpow.pop %v1683
      %v1685 = vmul.f32 %v1668, 1.442695
      %v1686 = vpow.pop %v1685
      %v1687 = vmul.f32 %v1669, 1.442695
      %v1688 = vpow.pop %v1687
      %v1689 = vmul.f32 %v1670, 1.442695
      %v1690 = vpow.pop %v1689
      %v1691 = vmul.f32 %v1671, 1.442695
      %v1692 = vpow.pop %v1691
      %v1693 = vmul.f32 %v1672, 1.442695
      %v1694 = vpow.pop %v1693
      %v1695 = vmul.f32 %v1673, 1.442695
      %v1696 = vpow.pop %v1695
      %v1697 = vmul.f32 %v1674, 1.442695
      %v1698 = vpow.pop %v1697
      %v1699 = vmul.f32 %v1675, 1.442695
      %v1700 = vpow.pop %v1699
      %v1701 = vmul.f32 %v1676, 1.442695
      %v1702 = vpow.pop %v1701
      %v1703 = vmul.f32 %v1677, 1.442695
      %v1704 = vpow.pop %v1703
      %v1705 = vmul.f32 %v1678, 1.442695
      %v1706 = vpow.pop %v1705
      %v1707 = vmul.f32 %v1679, 1.442695
      %v1708 = vpow.pop %v1707
      %v1709 = vmul.f32 %v1680, 1.442695
      %v1710 = vpow.pop %v1709
      %v1711 = vmul.f32 %v1681, 1.442695
      %v1712 = vpow.pop %v1711
      %v1713 = vmul.f32 %v1682, 1.442695
      %v1714 = vpow.pop %v1713
      %1715 = vadd.xlane.f32.xlu0 %v1684
      %v1716 = vpop.xlane.xlu0 %1715
      %1717 = vadd.xlane.f32.xlu0 %v1686
      %v1718 = vpop.xlane.xlu0 %1717
      %1719 = vadd.xlane.f32.xlu0 %v1688
      %v1720 = vpop.xlane.xlu0 %1719
      %1721 = vadd.xlane.f32.xlu0 %v1690
      %v1722 = vpop.xlane.xlu0 %1721
      %1723 = vadd.xlane.f32.xlu0 %v1692
      %v1724 = vpop.xlane.xlu0 %1723
      %1725 = vadd.xlane.f32.xlu0 %v1694
      %v1726 = vpop.xlane.xlu0 %1725
      %1727 = vadd.xlane.f32.xlu0 %v1696
      %v1728 = vpop.xlane.xlu0 %1727
      %1729 = vadd.xlane.f32.xlu0 %v1698
      %v1730 = vpop.xlane.xlu0 %1729
      %1731 = vadd.xlane.f32.xlu0 %v1700
      %v1732 = vpop.xlane.xlu0 %1731
      %1733 = vadd.xlane.f32.xlu0 %v1702
      %v1734 = vpop.xlane.xlu0 %1733
      %1735 = vadd.xlane.f32.xlu0 %v1704
      %v1736 = vpop.xlane.xlu0 %1735
      %1737 = vadd.xlane.f32.xlu0 %v1706
      %v1738 = vpop.xlane.xlu0 %1737
      %1739 = vadd.xlane.f32.xlu0 %v1708
      %v1740 = vpop.xlane.xlu0 %1739
      %1741 = vadd.xlane.f32.xlu0 %v1710
      %v1742 = vpop.xlane.xlu0 %1741
      %1743 = vadd.xlane.f32.xlu0 %v1712
      %v1744 = vpop.xlane.xlu0 %1743
      %1745 = vadd.xlane.f32.xlu0 %v1714
      %v1746 = vpop.xlane.xlu0 %1745
      %v1747 = vrcp.pop %v1716
      %v1748 = vrcp.pop %v1718
      %v1749 = vrcp.pop %v1720
      %v1750 = vrcp.pop %v1722
      %v1751 = vrcp.pop %v1724
      %v1752 = vrcp.pop %v1726
      %v1753 = vrcp.pop %v1728
      %v1754 = vrcp.pop %v1730
      %v1755 = vrcp.pop %v1732
      %v1756 = vrcp.pop %v1734
      %v1757 = vrcp.pop %v1736
      %v1758 = vrcp.pop %v1738
      %v1759 = vrcp.pop %v1740
      %v1760 = vrcp.pop %v1742
      %v1761 = vrcp.pop %v1744
      %v1762 = vrcp.pop %v1746
      %v1763 = vmul.f32 %v1684, %v1747
      %v1764 = vmul.f32 %v1686, %v1748
      %v1765 = vmul.f32 %v1688, %v1749
      %v1766 = vmul.f32 %v1690, %v1750
      %v1767 = vmul.f32 %v1692, %v1751
      %v1768 = vmul.f32 %v1694, %v1752
      %v1769 = vmul.f32 %v1696, %v1753
      %v1770 = vmul.f32 %v1698, %v1754
      %v1771 = vmul.f32 %v1700, %v1755
      %v1772 = vmul.f32 %v1702, %v1756
      %v1773 = vmul.f32 %v1704, %v1757
      %v1774 = vmul.f32 %v1706, %v1758
      %v1775 = vmul.f32 %v1708, %v1759
      %v1776 = vmul.f32 %v1710, %v1760
      %v1777 = vmul.f32 %v1712, %v1761
      %v1778 = vmul.f32 %v1714, %v1762
      %v1779 = vpack.c.bf16 %v1764, %v1763
      %v1780 = vpack.c.bf16 %v1766, %v1765
      %v1781 = vpack.c.bf16 %v1768, %v1767
      %v1782 = vpack.c.bf16 %v1770, %v1769
      %v1783 = vpack.c.bf16 %v1772, %v1771
      %v1784 = vpack.c.bf16 %v1774, %v1773
      %v1785 = vpack.c.bf16 %v1776, %v1775
      %v1786 = vpack.c.bf16 %v1778, %v1777
      %1787 = vrot.lane.b32.xlu0 %v1232, 64
      %v1788 = vpop.permute.xlu0 %1787
      %1789 = vrot.lane.b32.xlu0 %v1233, 64
      %v1790 = vpop.permute.xlu0 %1789
      %1791 = vrot.lane.b32.xlu0 %v1234, 64
      %v1792 = vpop.permute.xlu0 %1791
      %1793 = vrot.lane.b32.xlu0 %v1235, 64
      %v1794 = vpop.permute.xlu0 %1793
      %1795 = vrot.lane.b32.xlu0 %v1236, 64
      %v1796 = vpop.permute.xlu0 %1795
      %1797 = vrot.lane.b32.xlu0 %v1237, 64
      %v1798 = vpop.permute.xlu0 %1797
      %1799 = vrot.lane.b32.xlu0 %v1238, 64
      %v1800 = vpop.permute.xlu0 %1799
      %1801 = vrot.lane.b32.xlu0 %v1239, 64
      %v1802 = vpop.permute.xlu0 %1801
      %1811 = vmatprep.subr.bf16.mxu0 0
      %1812 = vmatpush1.bf16.msra.mxu0 %v1802
      %1813 = vmatprep.subr.bf16.mxu0 0
      %1814 = vmatpush1.bf16.msra.mxu0 %v1800
      %1815 = vmatprep.subr.bf16.mxu0 0
      %1816 = vmatpush1.bf16.msra.mxu0 %v1798
      %1817 = vmatprep.subr.bf16.mxu0 0
      %1818 = vmatpush1.bf16.msra.mxu0 %v1796
      %1819 = vmatprep.subr.bf16.mxu0 0
      %1820 = vmatpush1.bf16.msra.mxu0 %v1794
      %1821 = vmatprep.subr.bf16.mxu0 0
      %1822 = vmatpush1.bf16.msra.mxu0 %v1792
      %1823 = vmatprep.subr.bf16.mxu0 0
      %1824 = vmatpush1.bf16.msra.mxu0 %v1790
      %1825 = vmatprep.subr.bf16.mxu0 0
      %1826 = vmatpush1.bf16.msra.mxu0 %v1788
      %1827 = vmatprep.subr.bf16.mxu0 0
      %1828 = vmatpush2.bf16.msra.mxu0 0
      %1829 = vmatprep.subr.bf16.mxu0 0
      %1830 = vmatpush2.bf16.msra.mxu0 0
      %1831 = vmatprep.subr.bf16.mxu0 0
      %1832 = vmatpush2.bf16.msra.mxu0 0
      %1833 = vmatprep.subr.bf16.mxu0 0
      %1834 = vmatpush2.bf16.msra.mxu0 0
      %1835 = vmatprep.subr.bf16.mxu0 0
      %1836 = vmatpush2.bf16.msra.mxu0 0
      %1837 = vmatprep.subr.bf16.mxu0 0
      %1838 = vmatpush2.bf16.msra.mxu0 0
      %1839 = vmatprep.subr.bf16.mxu0 0
      %1840 = vmatpush2.bf16.msra.mxu0 0
      %1841 = vmatprep.subr.bf16.mxu0 0
      %1842 = vmatpush2.bf16.msra.mxu0 0
      %1843 = vmatprep.mubr.bf16.mxu0 0
      %1844 = vmatmul.mubr.bf16.gmra.mxu0 %v1779
      %v1845 = vpop.f32.mrf.mxu0
      %v1846 = vadd.f32 0.0, %v1845
      %v1847 = vpop.f32.mrf.mxu0
      %v1848 = vpop.f32.mrf.mxu0
      %v1849 = vadd.f32 0.0, %v1848
      %v1850 = vpop.f32.mrf.mxu0
      %1851 = vmatprep.mubr.bf16.mxu0 0
      %1852 = vmatmul.mubr.bf16.gmra.mxu0 %v1780
      %v1853 = vpop.f32.mrf.mxu0
      %v1854 = vadd.f32 0.0, %v1853
      %v1855 = vpop.f32.mrf.mxu0
      %v1856 = vpop.f32.mrf.mxu0
      %v1857 = vadd.f32 0.0, %v1856
      %v1858 = vpop.f32.mrf.mxu0
      %1859 = vmatprep.mubr.bf16.mxu0 0
      %1860 = vmatmul.mubr.bf16.gmra.mxu0 %v1781
      %v1861 = vpop.f32.mrf.mxu0
      %v1862 = vadd.f32 0.0, %v1861
      %v1863 = vpop.f32.mrf.mxu0
      %v1864 = vpop.f32.mrf.mxu0
      %v1865 = vadd.f32 0.0, %v1864
      %v1866 = vpop.f32.mrf.mxu0
      %1867 = vmatprep.mubr.bf16.mxu0 0
      %1868 = vmatmul.mubr.bf16.gmra.mxu0 %v1782
      %v1869 = vpop.f32.mrf.mxu0
      %v1870 = vadd.f32 0.0, %v1869
      %v1871 = vpop.f32.mrf.mxu0
      %v1872 = vpop.f32.mrf.mxu0
      %v1873 = vadd.f32 0.0, %v1872
      %v1874 = vpop.f32.mrf.mxu0
      %1875 = vmatprep.mubr.bf16.mxu0 0
      %1876 = vmatmul.mubr.bf16.gmra.mxu0 %v1783
      %v1877 = vpop.f32.mrf.mxu0
      %v1878 = vadd.f32 0.0, %v1877
      %v1879 = vpop.f32.mrf.mxu0
      %v1880 = vpop.f32.mrf.mxu0
      %v1881 = vadd.f32 0.0, %v1880
      %v1882 = vpop.f32.mrf.mxu0
      %1883 = vmatprep.mubr.bf16.mxu0 0
      %1884 = vmatmul.mubr.bf16.gmra.mxu0 %v1784
      %v1885 = vpop.f32.mrf.mxu0
      %v1886 = vadd.f32 0.0, %v1885
      %v1887 = vpop.f32.mrf.mxu0
      %v1888 = vpop.f32.mrf.mxu0
      %v1889 = vadd.f32 0.0, %v1888
      %v1890 = vpop.f32.mrf.mxu0
      %1891 = vmatprep.mubr.bf16.mxu0 0
      %1892 = vmatmul.mubr.bf16.gmra.mxu0 %v1785
      %v1893 = vpop.f32.mrf.mxu0
      %v1894 = vadd.f32 0.0, %v1893
      %v1895 = vpop.f32.mrf.mxu0
      %v1896 = vpop.f32.mrf.mxu0
      %v1897 = vadd.f32 0.0, %v1896
      %v1898 = vpop.f32.mrf.mxu0
      %1899 = vmatprep.mubr.bf16.mxu0 0
      %1900 = vmatmul.mubr.bf16.gmra.mxu0 %v1786
      %v1901 = vpop.f32.mrf.mxu0
      %v1902 = vadd.f32 0.0, %v1901
      %v1903 = vpop.f32.mrf.mxu0
      %v1904 = vpop.f32.mrf.mxu0
      %v1905 = vadd.f32 0.0, %v1904
      %v1906 = vpop.f32.mrf.mxu0
      %1907 = vdwg.mxu0
      %s1908 = sld [smem:[#allocation2]]
      %v1909 = vstv %s1908
      %v1910 = vmul.f32 %v1909, %v1846
      %v1911 = vmul.f32 %v1909, %v1849
      %v1912 = vmul.f32 %v1909, %v1854
      %v1913 = vmul.f32 %v1909, %v1857
      %v1914 = vmul.f32 %v1909, %v1862
      %v1915 = vmul.f32 %v1909, %v1865
      %v1916 = vmul.f32 %v1909, %v1870
      %v1917 = vmul.f32 %v1909, %v1873
      %v1918 = vmul.f32 %v1909, %v1878
      %v1919 = vmul.f32 %v1909, %v1881
      %v1920 = vmul.f32 %v1909, %v1886
      %v1921 = vmul.f32 %v1909, %v1889
      %v1922 = vmul.f32 %v1909, %v1894
      %v1923 = vmul.f32 %v1909, %v1897
      %v1924 = vmul.f32 %v1909, %v1902
      %v1925 = vmul.f32 %v1909, %v1905
      %v1926 = vadd.f32 %v1910, %v306
      %v1927 = vadd.f32 %v1911, %v307
      %v1928 = vadd.f32 %v1912, %v308
      %v1929 = vadd.f32 %v1913, %v309
      %v1930 = vadd.f32 %v1914, %v310
      %v1931 = vadd.f32 %v1915, %v311
      %v1932 = vadd.f32 %v1916, %v312
      %v1933 = vadd.f32 %v1917, %v313
      %v1934 = vadd.f32 %v1918, %v314
      %v1935 = vadd.f32 %v1919, %v315
      %v1936 = vadd.f32 %v1920, %v316
      %v1937 = vadd.f32 %v1921, %v317
      %v1938 = vadd.f32 %v1922, %v318
      %v1939 = vadd.f32 %v1923, %v319
      %v1940 = vadd.f32 %v1924, %v320
      %v1941 = vadd.f32 %v1925, %v321
      %v1942 = vsel %vm531, %v1926, %v306
      %v1943 = vsel %vm532, %v1927, %v307
      %v1944 = vsel %vm533, %v1928, %v308
      %v1945 = vsel %vm534, %v1929, %v309
      %v1946 = vsel %vm535, %v1930, %v310
      %v1947 = vsel %vm536, %v1931, %v311
      %v1948 = vsel %vm537, %v1932, %v312
      %v1949 = vsel %vm538, %v1933, %v313
      %v1950 = vsel %vm539, %v1934, %v314
      %v1951 = vsel %vm540, %v1935, %v315
      %v1952 = vsel %vm541, %v1936, %v316
      %v1953 = vsel %vm542, %v1937, %v317
      %v1954 = vsel %vm543, %v1938, %v318
      %v1955 = vsel %vm544, %v1939, %v319
      %v1956 = vsel %vm545, %v1940, %v320
      %v1957 = vsel %vm546, %v1941, %v321
      %1958 = vst.msk [vmem:[%s303] sm:$0xff] %vm793, %v1942
      %1959 = vst.msk [vmem:[%s303 + $0x8] sm:$0xff] %vm793, %v1943
      %1960 = vst.msk [vmem:[%s303 + $0x10] sm:$0xff] %vm793, %v1944
      %1961 = vst.msk [vmem:[%s303 + $0x18] sm:$0xff] %vm793, %v1945
      %1962 = vst.msk [vmem:[%s303 + $0x20] sm:$0xff] %vm793, %v1946
      %1963 = vst.msk [vmem:[%s303 + $0x28] sm:$0xff] %vm793, %v1947
      %1964 = vst.msk [vmem:[%s303 + $0x30] sm:$0xff] %vm793, %v1948
      %1965 = vst.msk [vmem:[%s303 + $0x38] sm:$0xff] %vm793, %v1949
      %1966 = vst.msk [vmem:[%s303 + $0x40] sm:$0xff] %vm793, %v1950
      %1967 = vst.msk [vmem:[%s303 + $0x48] sm:$0xff] %vm793, %v1951
      %1968 = vst.msk [vmem:[%s303 + $0x50] sm:$0xff] %vm793, %v1952
      %1969 = vst.msk [vmem:[%s303 + $0x58] sm:$0xff] %vm793, %v1953
      %1970 = vst.msk [vmem:[%s303 + $0x60] sm:$0xff] %vm793, %v1954
      %1971 = vst.msk [vmem:[%s303 + $0x68] sm:$0xff] %vm793, %v1955
      %1972 = vst.msk [vmem:[%s303 + $0x70] sm:$0xff] %vm793, %v1956
      %1973 = vst.msk [vmem:[%s303 + $0x78] sm:$0xff] %vm793, %v1957
      %s1974 = smul.u32 16, %s19
      %p1975 = scmp.lt.s32.totalorder %s1974, 31
      %s1976 = scalar_select %p1975, %s1974, 31
      %s1977 = smul.addr %s1976, 8
      %s1978 = scalar_lea.vmem %s7, %s1977
      // Predicated region
      $region49: #{tpu_custom_call.1} parent=47 // pred_check
        %p1979 = pneg %p194
      $region50: #{tpu_custom_call.1} parent=47 // pred_check_branch
        %1981 = sbr.rel (%p1979) target = $region52
      $region51: #{tpu_custom_call.1} parent=47 // pred_region
        %s1982 = smul.u32 16, %s19
      $region52: #{tpu_custom_call.1} parent=47 // pred_fallthru
        _
    $region48: #{tpu_custom_call.1} parent=5 // pred_fallthru
      _
    %p1983 = scmp.le.s32.totalorder 2, %s14
    // Predicated region
    $region53: #{tpu_custom_call.1} parent=5 // pred_check
      %p1984 = pneg %p1983
    $region54: #{tpu_custom_call.1} parent=5 // pred_check_branch
      %1986 = sbr.rel (%p1984) target = $region56
    $region55: #{tpu_custom_call.1} parent=5 // pred_region
      %s1987 = ssub.s32 %s14, 2
      // Predicated region
      $region57: #{tpu_custom_call.1} parent=55 // pred_check
        %p1988 = pneg %p200
      $region58: #{tpu_custom_call.1} parent=55 // pred_check_branch
        %1990 = sbr.rel (%p1988) target = $region60
      $region59: #{tpu_custom_call.1} parent=55 // pred_region
        %s1991 = smul.u32 16, %s20
        %p1992 = scmp.lt.s32.totalorder %s1991, 31
        %s1993 = scalar_select %p1992, %s1991, 31
        %s1994 = smul.addr %s1993, 8
        %s1995 = scalar_lea.vmem %s7, %s1994
      $region60: #{tpu_custom_call.1} parent=55 // pred_fallthru
        _
    $region56: #{tpu_custom_call.1} parent=5 // pred_fallthru
      _
  $region6: #{tpu_custom_call.1} parent=0 // loop_footer
    %s18 = sadd.s32 1, %s14
  $region7: #{tpu_custom_call.1} parent=0 // loop_footer_branch
    %13 = sbr.rel target = $region3
  $region8: #{tpu_custom_call.1} parent=0 // loop_exit
    _

</llo_original>
